<compile_context>
chip_gen: v6e
topology: v6e:2x2x1
jax: 0.10.0
libtpu: 0.0.40
codegen_flags: <defaults>
</compile_context>

<pallas_src>
import functools

import jax
import jax.numpy as jnp
from jax.experimental import pallas as pl
from jax.experimental.pallas import tpu as pltpu

NEG_SLOPE = 0.01  # nn.LeakyReLU default negative_slope


def _round_up(n, m):
    return (n + m - 1) // m * m


def _pad2(a, rows, cols):
    return jnp.pad(a, ((0, rows - a.shape[0]), (0, cols - a.shape[1])))


# ---------------------------------------------------------------------------
# Fused Pallas kernel: conv1 + LeakyReLU + conv2 + GDN + skip + residual
# ---------------------------------------------------------------------------
def _fused_kernel(p1_ref, xs_ref, w1_ref, b1_ref, w2_ref, b2_ref,
                  gT_ref, beta_ref, wsk_ref, bsk_ref, o_ref, buf_ref,
                  *, M, Wo, Cp, OFF, BUF):
    f32 = jnp.float32

    # Zero the height-padding regions of the line buffer (rows outside the
    # image represent conv2's zero padding).
    buf_ref[pl.ds(0, OFF), :] = jnp.zeros((OFF, Cp), f32)
    buf_ref[pl.ds(OFF + M, BUF - OFF - M), :] = jnp.zeros(
        (BUF - OFF - M, Cp), f32)

    # ---- conv1 (im2col matmul) + bias + LeakyReLU, kept resident in VMEM ----
    h1 = jnp.dot(p1_ref[0], w1_ref[...], preferred_element_type=f32)
    h1 = h1 + b1_ref[...]
    h1 = jnp.where(h1 >= 0, h1, NEG_SLOPE * h1)
    buf_ref[pl.ds(OFF, M), :] = h1

    # Column masks for the width wrap of the row-shift trick.
    col = jax.lax.broadcasted_iota(jnp.int32, (M, 1), 0) % Wo
    mask_l = (col > 0).astype(f32)        # taps that read column wo-1
    mask_r = (col < Wo - 1).astype(f32)   # taps that read column wo+1

    # ---- conv2 (3x3, stride 1, pad 1) as 9 shifted matmuls ------------------
    acc = jnp.zeros((M, Cp), f32) + b2_ref[...]
    for t in range(9):
        kh, kw = t // 3, t % 3
        s = OFF + (kh - 1) * Wo + (kw - 1)
        h_tap = buf_ref[pl.ds(s, M), :]
        if kw == 0:
            h_tap = h_tap * mask_l
        elif kw == 2:
            h_tap = h_tap * mask_r
        acc = acc + jnp.dot(h_tap, w2_ref[pl.ds(t * Cp, Cp), :],
                            preferred_element_type=f32)

    # ---- GDN: out * rsqrt(out^2 @ gamma^T + beta) ---------------------------
    norm = jnp.dot(acc * acc, gT_ref[...],
                   preferred_element_type=f32) + beta_ref[...]
    y = acc * jax.lax.rsqrt(norm)

    # ---- 1x1 stride-s skip conv + residual add ------------------------------
    skip = jnp.dot(xs_ref[0], wsk_ref[...],
                   preferred_element_type=f32) + bsk_ref[...]
    o_ref[0] = y + skip


# ---------------------------------------------------------------------------
# Glue (plain JAX inside jit): layout conversion, padding, patch extraction
# ---------------------------------------------------------------------------
def _im2col(x_nhwc, ksize, stride, pad, out_h, out_w):
    b, _, _, c = x_nhwc.shape
    xp = jnp.pad(x_nhwc, ((0, 0), (pad, pad), (pad, pad), (0, 0)))
    slabs = []
    for kh in range(ksize):
        for kw in range(ksize):
            slabs.append(
                xp[:, kh:kh + stride * out_h:stride,
                      kw:kw + stride * out_w:stride, :])
    patches = jnp.concatenate(slabs, axis=-1)       # (B, Ho, Wo, k*k*C)
    return patches.reshape(b * out_h * out_w, ksize * ksize * c)


@functools.partial(jax.jit, static_argnames=("stride",))
def _forward_core(x_nchw, w1, b1, w2, b2, wsk, bsk, gamma, beta, *, stride):
    x = jnp.transpose(x_nchw, (0, 2, 3, 1)).astype(jnp.float32)  # NCHW -> NHWC
    B, H, W, cin = x.shape
    cout = w1.shape[0]
    Ho = (H + 2 - 3) // stride + 1
    Wo = (W + 2 - 3) // stride + 1
    M = Ho * Wo

    Cp = _round_up(cout, 128)          # lane-dense channel width
    K1 = 9 * cin
    K1p = _round_up(K1, 128)           # lane-dense conv1 contraction
    Cin_p = _round_up(cin, 128)        # lane-dense skip contraction

    # conv1 patches (im2col), K padded, per-image blocks.
    p1 = _im2col(x, 3, stride, 1, Ho, Wo)                     # (B*M, 9*cin)
    p1 = jnp.pad(p1, ((0, 0), (0, K1p - K1))).reshape(B, M, K1p)

    # skip-branch input: spatial subsample (1x1 conv with stride).
    x_skip = x[:, :stride * Ho:stride, :stride * Wo:stride, :].reshape(B, M, cin)
    x_skip = jnp.pad(x_skip, ((0, 0), (0, 0), (0, Cin_p - cin)))

    # Weights / biases: matmul-ready, zero-padded to lane-dense shapes.
    w1_mat = _pad2(jnp.transpose(w1, (2, 3, 1, 0)).reshape(K1, cout), K1p, Cp)
    b1_row = jnp.pad(b1, (0, Cp - cout)).reshape(1, Cp)

    w2_t = jnp.transpose(w2, (2, 3, 1, 0))                    # (3,3,cin,cout)
    w2_t = jnp.pad(w2_t, ((0, 0), (0, 0), (0, Cp - cout), (0, Cp - cout)))
    w2_taps = w2_t.reshape(9 * Cp, Cp)                        # tap-major rows
    b2_row = jnp.pad(b2, (0, Cp - cout)).reshape(1, Cp)

    wsk_mat = _pad2(jnp.transpose(wsk[:, :, 0, 0]), Cin_p, Cp)
    bsk_row = jnp.pad(bsk, (0, Cp - cout)).reshape(1, Cp)

    gammaT = _pad2(jnp.transpose(gamma), Cp, Cp)
    # padded beta lanes = 1.0 so rsqrt on padded lanes stays finite
    beta_row = jnp.pad(beta, (0, Cp - cout), constant_values=1.0).reshape(1, Cp)

    # Line-buffer geometry for the in-kernel conv2 row-shift trick.
    OFF = _round_up(Wo + 1, 8)
    BUF = _round_up(OFF + M + Wo + 1, 8)

    kernel = functools.partial(_fused_kernel, M=M, Wo=Wo, Cp=Cp, OFF=OFF,
                               BUF=BUF)

    def _resident(shape):
        nd = len(shape)
        return pl.BlockSpec(shape, lambda b: (0,) * nd)

    flops = 2 * B * M * (K1p * Cp + 9 * Cp * Cp + Cp * Cp + Cin_p * Cp)
    bytes_accessed = 4 * (B * M * (K1p + Cin_p + Cp)
                          + K1p * Cp + 9 * Cp * Cp + Cp * Cp + Cin_p * Cp
                          + 4 * Cp)

    out = pl.pallas_call(
        kernel,
        out_shape=jax.ShapeDtypeStruct((B, M, Cp), jnp.float32),
        grid=(B,),
        in_specs=[
            pl.BlockSpec((1, M, K1p), lambda b: (b, 0, 0)),    # p1 patches
            pl.BlockSpec((1, M, Cin_p), lambda b: (b, 0, 0)),  # skip input
            _resident((K1p, Cp)),      # w1
            _resident((1, Cp)),        # b1
            _resident((9 * Cp, Cp)),   # w2 (tap-major)
            _resident((1, Cp)),        # b2
            _resident((Cp, Cp)),       # gamma^T
            _resident((1, Cp)),        # beta
            _resident((Cin_p, Cp)),    # w_skip
            _resident((1, Cp)),        # b_skip
        ],
        out_specs=pl.BlockSpec((1, M, Cp), lambda b: (b, 0, 0)),
        scratch_shapes=[pltpu.VMEM((BUF, Cp), jnp.float32)],
        compiler_params=pltpu.CompilerParams(
            dimension_semantics=("parallel",)),
        cost_estimate=pl.CostEstimate(flops=flops,
                                      transcendentals=B * M * Cp,
                                      bytes_accessed=bytes_accessed),
    )(p1, x_skip, w1_mat, b1_row, w2_taps, b2_row, gammaT, beta_row,
      wsk_mat, bsk_row)

    out = out[:, :, :cout].reshape(B, Ho, Wo, cout)
    return jnp.transpose(out, (0, 3, 1, 2))                    # back to NCHW


def _sliced_params(params, index_channel):
    # Static (Python-int) slide slicing, done eagerly OUTSIDE jit.
    in_s = params["in_ch_start"][index_channel]
    in_e = params["in_ch_end"][index_channel]
    out_s = params["out_ch_start"][index_channel]
    out_e = params["out_ch_end"][index_channel]
    return dict(
        w1=params["w1"][out_s:out_e, in_s:in_e],
        b1=params["b1"][out_s:out_e],
        w2=params["w2"][out_s:out_e, out_s:out_e],
        b2=params["b2"][out_s:out_e],
        wsk=params["wskip"][out_s:out_e, in_s:in_e],
        bsk=params["bskip"][out_s:out_e],
        gamma=params["gdn_gamma"][index_channel],
        beta=params["gdn_beta"][index_channel],
    )


def residual_block_forward(x_nchw, params, index_channel=0):
    sp = _sliced_params(params, index_channel)
    return _forward_core(x_nchw, sp["w1"], sp["b1"], sp["w2"], sp["b2"],
                         sp["wsk"], sp["bsk"], sp["gamma"], sp["beta"],
                         stride=int(params["stride"]))


# ---------------------------------------------------------------------------
# Pure-JAX reference (for correctness check)
# ---------------------------------------------------------------------------
def ref_forward(x_nchw, params, index_channel=0):
    stride = params["stride"]
    sp = _sliced_params(params, index_channel)
    cout = sp["b1"].shape[0]
    x = jnp.transpose(x_nchw, (0, 2, 3, 1)).astype(jnp.float32)

    def conv(xi, w_oihw, b, s, p):
        w = jnp.transpose(w_oihw, (2, 3, 1, 0))
        y = jax.lax.conv_general_dilated(
            xi, w, (s, s), [(p, p), (p, p)],
            dimension_numbers=("NHWC", "HWIO", "NHWC"),
            precision=jax.lax.Precision.HIGHEST)
        return y + b.reshape(1, 1, 1, -1)

    h = conv(x, sp["w1"], sp["b1"], stride, 1)
    h = jnp.where(h >= 0, h, NEG_SLOPE * h)
    out = conv(h, sp["w2"], sp["b2"], 1, 1)
    norm = conv(out * out, sp["gamma"].reshape(cout, cout, 1, 1),
                sp["beta"], 1, 0)
    out = out * jax.lax.rsqrt(norm)
    skip = conv(x, sp["wsk"], sp["bsk"], stride, 0)
    return jnp.transpose(out + skip, (0, 3, 1, 2))


# ---------------------------------------------------------------------------
# Deterministic parameter construction (synthetic, not a checkpoint load)
# ---------------------------------------------------------------------------
def make_params(in_ch, out_ch, in_ch_start, in_ch_end, out_ch_start,
                out_ch_end, stride, key):
    k1, k2, k3, k4, k5, k6 = jax.random.split(key, 6)
    norm_ch = [e - s for s, e in zip(out_ch_start, out_ch_end)]
    return dict(
        stride=stride,
        in_ch_start=in_ch_start, in_ch_end=in_ch_end,
        out_ch_start=out_ch_start, out_ch_end=out_ch_end,
        w1=0.1 * jax.random.normal(k1, (out_ch, in_ch, 3, 3), jnp.float32),
        b1=0.05 * jax.random.normal(k2, (out_ch,), jnp.float32),
        w2=0.1 * jax.random.normal(k3, (out_ch, out_ch, 3, 3), jnp.float32),
        b2=0.05 * jax.random.normal(k4, (out_ch,), jnp.float32),
        wskip=0.1 * jax.random.normal(k5, (out_ch, in_ch, 1, 1), jnp.float32),
        bskip=0.05 * jax.random.normal(k6, (out_ch,), jnp.float32),
        # GDN default init: beta = 1, gamma = 0.1 * I  (per slide width)
        gdn_beta=[jnp.ones((n,), jnp.float32) for n in norm_ch],
        gdn_gamma=[0.1 * jnp.eye(n, dtype=jnp.float32) for n in norm_ch],
    )


if __name__ == "__main__":
    key = jax.random.PRNGKey(0)
    kp, kx = jax.random.split(key)

    # module config: max widths 6 -> 12, active slide (index 0) uses 4 -> 8
    in_ch, out_ch = 6, 12
    in_ch_start, in_ch_end = [0], [4]
    out_ch_start, out_ch_end = [0], [8]
    stride = 2

    params = make_params(in_ch, out_ch, in_ch_start, in_ch_end,
                         out_ch_start, out_ch_end, stride, kp)

    # NCHW input with the sliced number of input channels
    x = jax.random.normal(kx, (2, 4, 16, 16), jnp.float32)

    y = residual_block_forward(x, params, 0)
    y = jax.block_until_ready(y)

    y_ref = ref_forward(x, params, 0)
    assert y.shape == (2, 8, 8, 8), y.shape
    # Tolerance covers MXU/XLA default-vs-highest f32 precision differences.
    assert jnp.allclose(y, y_ref, atol=1e-2, rtol=1e-2), float(
        jnp.max(jnp.abs(y - y_ref)))

    print("KERNEL_OK")
</pallas_src>

<mosaic_0001>
module attributes {stable_mosaic.version = 11 : i64} {
  func.func @_fused_kernel(%arg0: i32, %arg1: memref<1x64x128xf32, #tpu.memory_space<vmem>>, %arg2: memref<1x64x128xf32, #tpu.memory_space<vmem>>, %arg3: memref<128x128xf32, #tpu.memory_space<vmem>>, %arg4: memref<1x128xf32, #tpu.memory_space<vmem>>, %arg5: memref<1152x128xf32, #tpu.memory_space<vmem>>, %arg6: memref<1x128xf32, #tpu.memory_space<vmem>>, %arg7: memref<128x128xf32, #tpu.memory_space<vmem>>, %arg8: memref<1x128xf32, #tpu.memory_space<vmem>>, %arg9: memref<128x128xf32, #tpu.memory_space<vmem>>, %arg10: memref<1x128xf32, #tpu.memory_space<vmem>>, %arg11: memref<1x64x128xf32, #tpu.memory_space<vmem>>, %arg12: memref<96x128xf32, #tpu.memory_space<vmem>>) attributes {dimension_semantics = [#tpu.dimension_semantics<parallel>], iteration_bounds = array<i64: 2>, scalar_prefetch = 0 : i64, scratch_operands = 1 : i64, tpu.core_type = #tpu.core_type<tc>, window_params = [{transform_indices = @transform_0, window_bounds = array<i64: 1, 64, 128>}, {transform_indices = @transform_1, window_bounds = array<i64: 1, 64, 128>}, {pipeline_mode = #tpu.pipeline_mode<synchronous>, transform_indices = @transform_2, window_bounds = array<i64: 128, 128>}, {pipeline_mode = #tpu.pipeline_mode<synchronous>, transform_indices = @transform_3, window_bounds = array<i64: 1, 128>}, {pipeline_mode = #tpu.pipeline_mode<synchronous>, transform_indices = @transform_4, window_bounds = array<i64: 1152, 128>}, {pipeline_mode = #tpu.pipeline_mode<synchronous>, transform_indices = @transform_5, window_bounds = array<i64: 1, 128>}, {pipeline_mode = #tpu.pipeline_mode<synchronous>, transform_indices = @transform_6, window_bounds = array<i64: 128, 128>}, {pipeline_mode = #tpu.pipeline_mode<synchronous>, transform_indices = @transform_7, window_bounds = array<i64: 1, 128>}, {pipeline_mode = #tpu.pipeline_mode<synchronous>, transform_indices = @transform_8, window_bounds = array<i64: 128, 128>}, {pipeline_mode = #tpu.pipeline_mode<synchronous>, transform_indices = @transform_9, window_bounds = array<i64: 1, 128>}, {transform_indices = @transform_10, window_bounds = array<i64: 1, 64, 128>}]} {
    %cst = arith.constant 0.000000e+00 : f32
    %0 = vector.broadcast %cst : f32 to vector<16x128xf32>
    %c0 = arith.constant 0 : index
    %c0_0 = arith.constant 0 : index
    %1 = vector.load %arg12[%c0, %c0_0] : memref<96x128xf32, #tpu.memory_space<vmem>>, vector<16x128xf32>
    tpu.vector_store %arg12[%c0, %c0_0], %0 {strides = array<i32>} : memref<96x128xf32, #tpu.memory_space<vmem>>, vector<16x128xf32>,
    %cst_1 = arith.constant 0.000000e+00 : f32
    %2 = vector.broadcast %cst_1 : f32 to vector<16x128xf32>
    %c80 = arith.constant 80 : index
    %c0_2 = arith.constant 0 : index
    %3 = vector.load %arg12[%c80, %c0_2] : memref<96x128xf32, #tpu.memory_space<vmem>>, vector<16x128xf32>
    tpu.vector_store %arg12[%c80, %c0_2], %2 {strides = array<i32>} : memref<96x128xf32, #tpu.memory_space<vmem>>, vector<16x128xf32>,
    %c0_3 = arith.constant 0 : index
    %c0_4 = arith.constant 0 : index
    %c0_5 = arith.constant 0 : index
    %4 = vector.load %arg1[%c0_3, %c0_4, %c0_5] : memref<1x64x128xf32, #tpu.memory_space<vmem>>, vector<1x64x128xf32>
    %5 = vector.shape_cast %4 : vector<1x64x128xf32> to vector<64x128xf32>
    %c0_6 = arith.constant 0 : index
    %c0_7 = arith.constant 0 : index
    %6 = vector.load %arg3[%c0_6, %c0_7] : memref<128x128xf32, #tpu.memory_space<vmem>>, vector<128x128xf32>
    %cst_8 = arith.constant dense<0.000000e+00> : vector<64x128xf32>
    %7 = tpu.matmul %5, %6, %cst_8 {dimension_numbers = #tpu.dot_dimension_numbers<[1], [0], [0], [1], [0, 0, 1, 1], [], []>} : vector<64x128xf32>, vector<128x128xf32>, vector<64x128xf32> -> vector<64x128xf32>
    %c0_9 = arith.constant 0 : index
    %c0_10 = arith.constant 0 : index
    %8 = vector.load %arg4[%c0_9, %c0_10] : memref<1x128xf32, #tpu.memory_space<vmem>>, vector<1x128xf32>
    %9 = vector.broadcast %8 : vector<1x128xf32> to vector<64x128xf32>
    %10 = arith.addf %7, %9 : vector<64x128xf32>
    %cst_11 = arith.constant 0.000000e+00 : f32
    %11 = vector.broadcast %cst_11 : f32 to vector<64x128xf32>
    %12 = arith.cmpf oge, %10, %11 : vector<64x128xf32>
    %cst_12 = arith.constant 0.00999999977 : f32
    %13 = vector.broadcast %cst_12 : f32 to vector<64x128xf32>
    %14 = arith.mulf %13, %10 : vector<64x128xf32>
    %15 = arith.select %12, %10, %14 : vector<64x128xi1>, vector<64x128xf32>
    %c16 = arith.constant 16 : index
    %c0_13 = arith.constant 0 : index
    %16 = vector.load %arg12[%c16, %c0_13] : memref<96x128xf32, #tpu.memory_space<vmem>>, vector<64x128xf32>
    tpu.vector_store %arg12[%c16, %c0_13], %15 {strides = array<i32>} : memref<96x128xf32, #tpu.memory_space<vmem>>, vector<64x128xf32>,
    %17 = tpu.iota {dimensions = array<i32: 0>} : vector<64x1xi32>
    %c8_i32 = arith.constant 8 : i32
    %c0_i32 = arith.constant 0 : i32
    %18 = arith.cmpi eq, %c8_i32, %c0_i32 : i32
    %c1_i32 = arith.constant 1 : i32
    %19 = arith.select %18, %c1_i32, %c8_i32 : i32
    %20 = vector.broadcast %19 : i32 to vector<64x1xi32>
    %21 = arith.remsi %17, %20 : vector<64x1xi32>
    %c0_i32_14 = arith.constant 0 : i32
    %22 = vector.broadcast %c0_i32_14 : i32 to vector<64x1xi32>
    %23 = arith.cmpi ne, %21, %22 : vector<64x1xi32>
    %c0_i32_15 = arith.constant 0 : i32
    %24 = vector.broadcast %c0_i32_15 : i32 to vector<64x1xi32>
    %25 = arith.cmpi slt, %21, %24 : vector<64x1xi32>
    %c0_i32_16 = arith.constant 0 : i32
    %26 = arith.cmpi slt, %19, %c0_i32_16 : i32
    %27 = vector.broadcast %26 : i1 to vector<64x1xi1>
    %28 = vector.broadcast %27 : vector<64x1xi1> to vector<64x1xi1>
    %29 = arith.xori %25, %28 : vector<64x1xi1>
    %30 = arith.andi %29, %23 : vector<64x1xi1>
    %31 = vector.broadcast %19 : i32 to vector<64x1xi32>
    %32 = arith.addi %21, %31 : vector<64x1xi32>
    %33 = arith.select %30, %32, %21 : vector<64x1xi1>, vector<64x1xi32>
    %c0_i32_17 = arith.constant 0 : i32
    %34 = vector.broadcast %c0_i32_17 : i32 to vector<64x1xi32>
    %35 = arith.cmpi sgt, %33, %34 : vector<64x1xi32>
    %36 = arith.extui %35 : vector<64x1xi1> to vector<64x1xi32>
    %37 = arith.sitofp %36 : vector<64x1xi32> to vector<64x1xf32>
    %c7_i32 = arith.constant 7 : i32
    %38 = vector.broadcast %c7_i32 : i32 to vector<64x1xi32>
    %39 = arith.cmpi slt, %33, %38 : vector<64x1xi32>
    %40 = arith.extui %39 : vector<64x1xi1> to vector<64x1xi32>
    %41 = arith.sitofp %40 : vector<64x1xi32> to vector<64x1xf32>
    %cst_18 = arith.constant 0.000000e+00 : f32
    %42 = vector.broadcast %cst_18 : f32 to vector<64x128xf32>
    %c0_19 = arith.constant 0 : index
    %c0_20 = arith.constant 0 : index
    %43 = vector.load %arg6[%c0_19, %c0_20] : memref<1x128xf32, #tpu.memory_space<vmem>>, vector<1x128xf32>
    %44 = vector.broadcast %43 : vector<1x128xf32> to vector<64x128xf32>
    %45 = arith.addf %42, %44 : vector<64x128xf32>
    %c7 = arith.constant 7 : index
    %c0_21 = arith.constant 0 : index
    %46 = vector.load %arg12[%c7, %c0_21] : memref<96x128xf32, #tpu.memory_space<vmem>>, vector<64x128xf32>
    %47 = vector.broadcast %37 : vector<64x1xf32> to vector<64x128xf32>
    %48 = arith.mulf %46, %47 : vector<64x128xf32>
    %c0_22 = arith.constant 0 : index
    %c0_23 = arith.constant 0 : index
    %49 = vector.load %arg5[%c0_22, %c0_23] : memref<1152x128xf32, #tpu.memory_space<vmem>>, vector<128x128xf32>
    %cst_24 = arith.constant dense<0.000000e+00> : vector<64x128xf32>
    %50 = tpu.matmul %48, %49, %cst_24 {dimension_numbers = #tpu.dot_dimension_numbers<[1], [0], [0], [1], [0, 0, 1, 1], [], []>} : vector<64x128xf32>, vector<128x128xf32>, vector<64x128xf32> -> vector<64x128xf32>
    %51 = arith.addf %45, %50 : vector<64x128xf32>
    %c8 = arith.constant 8 : index
    %c0_25 = arith.constant 0 : index
    %52 = vector.load %arg12[%c8, %c0_25] : memref<96x128xf32, #tpu.memory_space<vmem>>, vector<64x128xf32>
    %c128 = arith.constant 128 : index
    %c0_26 = arith.constant 0 : index
    %53 = vector.load %arg5[%c128, %c0_26] : memref<1152x128xf32, #tpu.memory_space<vmem>>, vector<128x128xf32>
    %cst_27 = arith.constant dense<0.000000e+00> : vector<64x128xf32>
    %54 = tpu.matmul %52, %53, %cst_27 {dimension_numbers = #tpu.dot_dimension_numbers<[1], [0], [0], [1], [0, 0, 1, 1], [], []>} : vector<64x128xf32>, vector<128x128xf32>, vector<64x128xf32> -> vector<64x128xf32>
    %55 = arith.addf %51, %54 : vector<64x128xf32>
    %c9 = arith.constant 9 : index
    %c0_28 = arith.constant 0 : index
    %56 = vector.load %arg12[%c9, %c0_28] : memref<96x128xf32, #tpu.memory_space<vmem>>, vector<64x128xf32>
    %57 = vector.broadcast %41 : vector<64x1xf32> to vector<64x128xf32>
    %58 = arith.mulf %56, %57 : vector<64x128xf32>
    %c256 = arith.constant 256 : index
    %c0_29 = arith.constant 0 : index
    %59 = vector.load %arg5[%c256, %c0_29] : memref<1152x128xf32, #tpu.memory_space<vmem>>, vector<128x128xf32>
    %cst_30 = arith.constant dense<0.000000e+00> : vector<64x128xf32>
    %60 = tpu.matmul %58, %59, %cst_30 {dimension_numbers = #tpu.dot_dimension_numbers<[1], [0], [0], [1], [0, 0, 1, 1], [], []>} : vector<64x128xf32>, vector<128x128xf32>, vector<64x128xf32> -> vector<64x128xf32>
    %61 = arith.addf %55, %60 : vector<64x128xf32>
    %c15 = arith.constant 15 : index
    %c0_31 = arith.constant 0 : index
    %62 = vector.load %arg12[%c15, %c0_31] : memref<96x128xf32, #tpu.memory_space<vmem>>, vector<64x128xf32>
    %63 = vector.broadcast %37 : vector<64x1xf32> to vector<64x128xf32>
    %64 = arith.mulf %62, %63 : vector<64x128xf32>
    %c384 = arith.constant 384 : index
    %c0_32 = arith.constant 0 : index
    %65 = vector.load %arg5[%c384, %c0_32] : memref<1152x128xf32, #tpu.memory_space<vmem>>, vector<128x128xf32>
    %cst_33 = arith.constant dense<0.000000e+00> : vector<64x128xf32>
    %66 = tpu.matmul %64, %65, %cst_33 {dimension_numbers = #tpu.dot_dimension_numbers<[1], [0], [0], [1], [0, 0, 1, 1], [], []>} : vector<64x128xf32>, vector<128x128xf32>, vector<64x128xf32> -> vector<64x128xf32>
    %67 = arith.addf %61, %66 : vector<64x128xf32>
    %c16_34 = arith.constant 16 : index
    %c0_35 = arith.constant 0 : index
    %68 = vector.load %arg12[%c16_34, %c0_35] : memref<96x128xf32, #tpu.memory_space<vmem>>, vector<64x128xf32>
    %c512 = arith.constant 512 : index
    %c0_36 = arith.constant 0 : index
    %69 = vector.load %arg5[%c512, %c0_36] : memref<1152x128xf32, #tpu.memory_space<vmem>>, vector<128x128xf32>
    %cst_37 = arith.constant dense<0.000000e+00> : vector<64x128xf32>
    %70 = tpu.matmul %68, %69, %cst_37 {dimension_numbers = #tpu.dot_dimension_numbers<[1], [0], [0], [1], [0, 0, 1, 1], [], []>} : vector<64x128xf32>, vector<128x128xf32>, vector<64x128xf32> -> vector<64x128xf32>
    %71 = arith.addf %67, %70 : vector<64x128xf32>
    %c17 = arith.constant 17 : index
    %c0_38 = arith.constant 0 : index
    %72 = vector.load %arg12[%c17, %c0_38] : memref<96x128xf32, #tpu.memory_space<vmem>>, vector<64x128xf32>
    %73 = vector.broadcast %41 : vector<64x1xf32> to vector<64x128xf32>
    %74 = arith.mulf %72, %73 : vector<64x128xf32>
    %c640 = arith.constant 640 : index
    %c0_39 = arith.constant 0 : index
    %75 = vector.load %arg5[%c640, %c0_39] : memref<1152x128xf32, #tpu.memory_space<vmem>>, vector<128x128xf32>
    %cst_40 = arith.constant dense<0.000000e+00> : vector<64x128xf32>
    %76 = tpu.matmul %74, %75, %cst_40 {dimension_numbers = #tpu.dot_dimension_numbers<[1], [0], [0], [1], [0, 0, 1, 1], [], []>} : vector<64x128xf32>, vector<128x128xf32>, vector<64x128xf32> -> vector<64x128xf32>
    %77 = arith.addf %71, %76 : vector<64x128xf32>
    %c23 = arith.constant 23 : index
    %c0_41 = arith.constant 0 : index
    %78 = vector.load %arg12[%c23, %c0_41] : memref<96x128xf32, #tpu.memory_space<vmem>>, vector<64x128xf32>
    %79 = vector.broadcast %37 : vector<64x1xf32> to vector<64x128xf32>
    %80 = arith.mulf %78, %79 : vector<64x128xf32>
    %c768 = arith.constant 768 : index
    %c0_42 = arith.constant 0 : index
    %81 = vector.load %arg5[%c768, %c0_42] : memref<1152x128xf32, #tpu.memory_space<vmem>>, vector<128x128xf32>
    %cst_43 = arith.constant dense<0.000000e+00> : vector<64x128xf32>
    %82 = tpu.matmul %80, %81, %cst_43 {dimension_numbers = #tpu.dot_dimension_numbers<[1], [0], [0], [1], [0, 0, 1, 1], [], []>} : vector<64x128xf32>, vector<128x128xf32>, vector<64x128xf32> -> vector<64x128xf32>
    %83 = arith.addf %77, %82 : vector<64x128xf32>
    %c24 = arith.constant 24 : index
    %c0_44 = arith.constant 0 : index
    %84 = vector.load %arg12[%c24, %c0_44] : memref<96x128xf32, #tpu.memory_space<vmem>>, vector<64x128xf32>
    %c896 = arith.constant 896 : index
    %c0_45 = arith.constant 0 : index
    %85 = vector.load %arg5[%c896, %c0_45] : memref<1152x128xf32, #tpu.memory_space<vmem>>, vector<128x128xf32>
    %cst_46 = arith.constant dense<0.000000e+00> : vector<64x128xf32>
    %86 = tpu.matmul %84, %85, %cst_46 {dimension_numbers = #tpu.dot_dimension_numbers<[1], [0], [0], [1], [0, 0, 1, 1], [], []>} : vector<64x128xf32>, vector<128x128xf32>, vector<64x128xf32> -> vector<64x128xf32>
    %87 = arith.addf %83, %86 : vector<64x128xf32>
    %c25 = arith.constant 25 : index
    %c0_47 = arith.constant 0 : index
    %88 = vector.load %arg12[%c25, %c0_47] : memref<96x128xf32, #tpu.memory_space<vmem>>, vector<64x128xf32>
    %89 = vector.broadcast %41 : vector<64x1xf32> to vector<64x128xf32>
    %90 = arith.mulf %88, %89 : vector<64x128xf32>
    %c1024 = arith.constant 1024 : index
    %c0_48 = arith.constant 0 : index
    %91 = vector.load %arg5[%c1024, %c0_48] : memref<1152x128xf32, #tpu.memory_space<vmem>>, vector<128x128xf32>
    %cst_49 = arith.constant dense<0.000000e+00> : vector<64x128xf32>
    %92 = tpu.matmul %90, %91, %cst_49 {dimension_numbers = #tpu.dot_dimension_numbers<[1], [0], [0], [1], [0, 0, 1, 1], [], []>} : vector<64x128xf32>, vector<128x128xf32>, vector<64x128xf32> -> vector<64x128xf32>
    %93 = arith.addf %87, %92 : vector<64x128xf32>
    %94 = arith.mulf %93, %93 : vector<64x128xf32>
    %c0_50 = arith.constant 0 : index
    %c0_51 = arith.constant 0 : index
    %95 = vector.load %arg7[%c0_50, %c0_51] : memref<128x128xf32, #tpu.memory_space<vmem>>, vector<128x128xf32>
    %cst_52 = arith.constant dense<0.000000e+00> : vector<64x128xf32>
    %96 = tpu.matmul %94, %95, %cst_52 {dimension_numbers = #tpu.dot_dimension_numbers<[1], [0], [0], [1], [0, 0, 1, 1], [], []>} : vector<64x128xf32>, vector<128x128xf32>, vector<64x128xf32> -> vector<64x128xf32>
    %c0_53 = arith.constant 0 : index
    %c0_54 = arith.constant 0 : index
    %97 = vector.load %arg8[%c0_53, %c0_54] : memref<1x128xf32, #tpu.memory_space<vmem>>, vector<1x128xf32>
    %98 = vector.broadcast %97 : vector<1x128xf32> to vector<64x128xf32>
    %99 = arith.addf %96, %98 : vector<64x128xf32>
    %100 = math.rsqrt %99 : vector<64x128xf32>
    %101 = arith.mulf %93, %100 : vector<64x128xf32>
    %c0_55 = arith.constant 0 : index
    %c0_56 = arith.constant 0 : index
    %c0_57 = arith.constant 0 : index
    %102 = vector.load %arg2[%c0_55, %c0_56, %c0_57] : memref<1x64x128xf32, #tpu.memory_space<vmem>>, vector<1x64x128xf32>
    %103 = vector.shape_cast %102 : vector<1x64x128xf32> to vector<64x128xf32>
    %c0_58 = arith.constant 0 : index
    %c0_59 = arith.constant 0 : index
    %104 = vector.load %arg9[%c0_58, %c0_59] : memref<128x128xf32, #tpu.memory_space<vmem>>, vector<128x128xf32>
    %cst_60 = arith.constant dense<0.000000e+00> : vector<64x128xf32>
    %105 = tpu.matmul %103, %104, %cst_60 {dimension_numbers = #tpu.dot_dimension_numbers<[1], [0], [0], [1], [0, 0, 1, 1], [], []>} : vector<64x128xf32>, vector<128x128xf32>, vector<64x128xf32> -> vector<64x128xf32>
    %c0_61 = arith.constant 0 : index
    %c0_62 = arith.constant 0 : index
    %106 = vector.load %arg10[%c0_61, %c0_62] : memref<1x128xf32, #tpu.memory_space<vmem>>, vector<1x128xf32>
    %107 = vector.broadcast %106 : vector<1x128xf32> to vector<64x128xf32>
    %108 = arith.addf %105, %107 : vector<64x128xf32>
    %109 = arith.addf %101, %108 : vector<64x128xf32>
    %c0_63 = arith.constant 0 : index
    %c0_64 = arith.constant 0 : index
    %c0_65 = arith.constant 0 : index
    %110 = vector.load %arg11[%c0_63, %c0_64, %c0_65] : memref<1x64x128xf32, #tpu.memory_space<vmem>>, vector<1x64x128xf32>
    %111 = vector.shape_cast %110 : vector<1x64x128xf32> to vector<64x128xf32>
    %112 = vector.shape_cast %109 : vector<64x128xf32> to vector<1x64x128xf32>
    tpu.vector_store %arg11[%c0_63, %c0_64, %c0_65], %112 {strides = array<i32>} : memref<1x64x128xf32, #tpu.memory_space<vmem>>, vector<1x64x128xf32>,
    return
  }
  func.func @transform_0(%arg0: i32) -> (i32, i32, i32) {
    %c0_i32 = arith.constant 0 : i32
    %c0_i32_0 = arith.constant 0 : i32
    %c0_i32_1 = arith.constant 0 : i32
    return %arg0, %c0_i32, %c0_i32_0 : i32, i32, i32
  }
  func.func @transform_1(%arg0: i32) -> (i32, i32, i32) {
    %c0_i32 = arith.constant 0 : i32
    %c0_i32_0 = arith.constant 0 : i32
    %c0_i32_1 = arith.constant 0 : i32
    return %arg0, %c0_i32, %c0_i32_0 : i32, i32, i32
  }
  func.func @transform_2(%arg0: i32) -> (i32, i32) {
    %c0_i32 = arith.constant 0 : i32
    %c0_i32_0 = arith.constant 0 : i32
    %c0_i32_1 = arith.constant 0 : i32
    return %c0_i32, %c0_i32_0 : i32, i32
  }
  func.func @transform_3(%arg0: i32) -> (i32, i32) {
    %c0_i32 = arith.constant 0 : i32
    %c0_i32_0 = arith.constant 0 : i32
    %c0_i32_1 = arith.constant 0 : i32
    return %c0_i32, %c0_i32_0 : i32, i32
  }
  func.func @transform_4(%arg0: i32) -> (i32, i32) {
    %c0_i32 = arith.constant 0 : i32
    %c0_i32_0 = arith.constant 0 : i32
    %c0_i32_1 = arith.constant 0 : i32
    return %c0_i32, %c0_i32_0 : i32, i32
  }
  func.func @transform_5(%arg0: i32) -> (i32, i32) {
    %c0_i32 = arith.constant 0 : i32
    %c0_i32_0 = arith.constant 0 : i32
    %c0_i32_1 = arith.constant 0 : i32
    return %c0_i32, %c0_i32_0 : i32, i32
  }
  func.func @transform_6(%arg0: i32) -> (i32, i32) {
    %c0_i32 = arith.constant 0 : i32
    %c0_i32_0 = arith.constant 0 : i32
    %c0_i32_1 = arith.constant 0 : i32
    return %c0_i32, %c0_i32_0 : i32, i32
  }
  func.func @transform_7(%arg0: i32) -> (i32, i32) {
    %c0_i32 = arith.constant 0 : i32
    %c0_i32_0 = arith.constant 0 : i32
    %c0_i32_1 = arith.constant 0 : i32
    return %c0_i32, %c0_i32_0 : i32, i32
  }
  func.func @transform_8(%arg0: i32) -> (i32, i32) {
    %c0_i32 = arith.constant 0 : i32
    %c0_i32_0 = arith.constant 0 : i32
    %c0_i32_1 = arith.constant 0 : i32
    return %c0_i32, %c0_i32_0 : i32, i32
  }
  func.func @transform_9(%arg0: i32) -> (i32, i32) {
    %c0_i32 = arith.constant 0 : i32
    %c0_i32_0 = arith.constant 0 : i32
    %c0_i32_1 = arith.constant 0 : i32
    return %c0_i32, %c0_i32_0 : i32, i32
  }
  func.func @transform_10(%arg0: i32) -> (i32, i32, i32) {
    %c0_i32 = arith.constant 0 : i32
    %c0_i32_0 = arith.constant 0 : i32
    %c0_i32_1 = arith.constant 0 : i32
    return %arg0, %c0_i32, %c0_i32_0 : i32, i32, i32
  }
}

</mosaic_0001>

<llo_original>
// kernel: _forward_core.1
$region0: #{_forward_core.1}
  #allocation0 [shape = 'u32[]', space=smem, size = 0x4, offset = 0x4, fixed_abs, tag = 'smem constant byte address 0x4 - core index']
  #allocation1 [shape = 'u32[144,128]{1,0:T(1,128)}', space=vmem, size = 0x12000, scoped, tag = 'internal scratch']
  #allocation2 [shape = 'f32[96,128]{1,0:T(8,128)}', space=vmem, size = 0xc000, scoped, tag = 'scratch operand']
  %s0 = inlined_call_operand.vmem [shape: f32[2,64,128], index: 0, kind: input, shape index: {}]
  %s1 = inlined_call_operand.vmem [shape: f32[2,64,128], index: 1, kind: input, shape index: {}]
  %s2 = inlined_call_operand.vmem [shape: f32[128,128], index: 2, kind: input, shape index: {}]
  %s3 = inlined_call_operand.vmem [shape: f32[1,128], index: 3, kind: input, shape index: {}]
  %s4 = inlined_call_operand.vmem [shape: f32[1152,128], index: 4, kind: input, shape index: {}]
  %s5 = inlined_call_operand.vmem [shape: f32[1,128], index: 5, kind: input, shape index: {}]
  %s6 = inlined_call_operand.vmem [shape: f32[128,128], index: 6, kind: input, shape index: {}]
  %s7 = inlined_call_operand.vmem [shape: f32[1,128], index: 7, kind: input, shape index: {}]
  %s8 = inlined_call_operand.vmem [shape: f32[128,128], index: 8, kind: input, shape index: {}]
  %s9 = inlined_call_operand.vmem [shape: f32[1,128], index: 9, kind: input, shape index: {}]
  %s10 = inlined_call_operand.vmem [shape: f32[2,64,128], index: 10, kind: output, shape index: {}]
  %s11 = sld [smem:[#allocation0]]
  $region73: #{_forward_core.1} parent=0
    _
  %s13 = ssub.s32 1, %s11
  %s14 = scalar_select 0, %s13, %s11
  loop: start=0, step=1, limit=4
  $region2: #{_forward_core.1} parent=0 // loop_pre_header
    _
  $region3: #{_forward_core.1} parent=0 // loop_header
    %s16 = sphi 0, %s20
    %p17 = scmp.ge.s32.totalorder %s16, 4
    %s26 = sphi 0, %s28
    %s29 = sphi 0, %s26
    %s30 = sphi 0, %s29
    %s46 = sphi 0, %s30
    %s52 = sphi 0, %s54
    %s55 = sphi 0, %s52
    %s56 = sphi 0, %s55
    %s72 = sphi 0, %s56
    %s76 = sphi 0, %s76
    %s78 = sphi 0, %s76
    %s79 = sphi 0, %s78
    %s93 = sphi 0, %s79
    %s97 = sphi 0, %s97
    %s99 = sphi 0, %s97
    %s100 = sphi 0, %s99
    %s114 = sphi 0, %s100
    %s118 = sphi 0, %s118
    %s120 = sphi 0, %s118
    %s121 = sphi 0, %s120
    %s135 = sphi 0, %s121
    %s139 = sphi 0, %s139
    %s141 = sphi 0, %s139
    %s142 = sphi 0, %s141
    %s156 = sphi 0, %s142
    %s160 = sphi 0, %s160
    %s162 = sphi 0, %s160
    %s163 = sphi 0, %s162
    %s177 = sphi 0, %s163
    %s181 = sphi 0, %s181
    %s183 = sphi 0, %s181
    %s184 = sphi 0, %s183
    %s198 = sphi 0, %s184
    %s202 = sphi 0, %s202
    %s204 = sphi 0, %s202
    %s205 = sphi 0, %s204
    %s219 = sphi 0, %s205
    %s223 = sphi 0, %s223
    %s225 = sphi 0, %s223
    %s226 = sphi 0, %s225
    %s240 = sphi 0, %s226
    %s246 = sphi 0, %s248
    %s249 = sphi 0, %s246
    %s250 = sphi 0, %s249
    %s266 = sphi 0, %s250
  $region4: #{_forward_core.1} parent=0 // loop_header_branch
    %19 = sbr.rel (%p17) target = $region8
  $region5: #{_forward_core.1} parent=0 // loop_body
    %s21 = ssub.s32 %s16, 1
    %s22 = ssub.s32 %s16, 2
    %s23 = sadd.s32 %s16, 1
    %s24 = ssub.s32 %s16, %s23
    %p25 = scmp.eq.s32.totalorder %s24, 0
    %s27 = sadd.s32 %s26, 1
    %s28 = scalar_select %p25, %s26, %s27
    %p31 = pneg %p25
    %p32 = scmp.eq.s32.totalorder %s16, 1
    %p33 = por %p31, %p32
    %p34 = scmp.ne.s32.totalorder %s26, %s29
    %p35 = scmp.eq.s32.totalorder %s16, 0
    %p36 = por %p34, %p35
    %p37 = scmp.ne.s32.totalorder %s26, %s29
    %p38 = scmp.eq.s32.totalorder %s21, 1
    %p39 = por %p37, %p38
    %p40 = scmp.ne.s32.totalorder %s29, %s30
    %p41 = scmp.eq.s32.totalorder %s21, 0
    %p42 = por %p40, %p41
    %p43 = scmp.ne.s32.totalorder %s29, %s30
    %p44 = scmp.eq.s32.totalorder %s22, 1
    %p45 = por %p43, %p44
    %p47 = scmp.ne.s32.totalorder %s30, %s46
    %p48 = scmp.eq.s32.totalorder %s22, 0
    %p49 = por %p47, %p48
    %s50 = ssub.s32 %s16, %s23
    %p51 = scmp.eq.s32.totalorder %s50, 0
    %s53 = sadd.s32 %s52, 1
    %s54 = scalar_select %p51, %s52, %s53
    %p57 = pneg %p51
    %p58 = scmp.eq.s32.totalorder %s16, 1
    %p59 = por %p57, %p58
    %p60 = scmp.ne.s32.totalorder %s52, %s55
    %p61 = scmp.eq.s32.totalorder %s16, 0
    %p62 = por %p60, %p61
    %p63 = scmp.ne.s32.totalorder %s52, %s55
    %p64 = scmp.eq.s32.totalorder %s21, 1
    %p65 = por %p63, %p64
    %p66 = scmp.ne.s32.totalorder %s55, %s56
    %p67 = scmp.eq.s32.totalorder %s21, 0
    %p68 = por %p66, %p67
    %p69 = scmp.ne.s32.totalorder %s55, %s56
    %p70 = scmp.eq.s32.totalorder %s22, 1
    %p71 = por %p69, %p70
    %p73 = scmp.ne.s32.totalorder %s56, %s72
    %p74 = scmp.eq.s32.totalorder %s22, 0
    %p75 = por %p73, %p74
    %s77 = sadd.s32 %s76, 1
    %p80 = scmp.eq.s32.totalorder %s16, 1
    %p81 = scmp.ne.s32.totalorder %s76, %s78
    %p82 = scmp.eq.s32.totalorder %s16, 0
    %p83 = por %p81, %p82
    %p84 = scmp.ne.s32.totalorder %s76, %s78
    %p85 = scmp.eq.s32.totalorder %s21, 1
    %p86 = por %p84, %p85
    %p87 = scmp.ne.s32.totalorder %s78, %s79
    %p88 = scmp.eq.s32.totalorder %s21, 0
    %p89 = por %p87, %p88
    %p90 = scmp.ne.s32.totalorder %s78, %s79
    %p91 = scmp.eq.s32.totalorder %s22, 1
    %p92 = por %p90, %p91
    %p94 = scmp.ne.s32.totalorder %s79, %s93
    %p95 = scmp.eq.s32.totalorder %s22, 0
    %p96 = por %p94, %p95
    %s98 = sadd.s32 %s97, 1
    %p101 = scmp.eq.s32.totalorder %s16, 1
    %p102 = scmp.ne.s32.totalorder %s97, %s99
    %p103 = scmp.eq.s32.totalorder %s16, 0
    %p104 = por %p102, %p103
    %p105 = scmp.ne.s32.totalorder %s97, %s99
    %p106 = scmp.eq.s32.totalorder %s21, 1
    %p107 = por %p105, %p106
    %p108 = scmp.ne.s32.totalorder %s99, %s100
    %p109 = scmp.eq.s32.totalorder %s21, 0
    %p110 = por %p108, %p109
    %p111 = scmp.ne.s32.totalorder %s99, %s100
    %p112 = scmp.eq.s32.totalorder %s22, 1
    %p113 = por %p111, %p112
    %p115 = scmp.ne.s32.totalorder %s100, %s114
    %p116 = scmp.eq.s32.totalorder %s22, 0
    %p117 = por %p115, %p116
    %s119 = sadd.s32 %s118, 1
    %p122 = scmp.eq.s32.totalorder %s16, 1
    %p123 = scmp.ne.s32.totalorder %s118, %s120
    %p124 = scmp.eq.s32.totalorder %s16, 0
    %p125 = por %p123, %p124
    %p126 = scmp.ne.s32.totalorder %s118, %s120
    %p127 = scmp.eq.s32.totalorder %s21, 1
    %p128 = por %p126, %p127
    %p129 = scmp.ne.s32.totalorder %s120, %s121
    %p130 = scmp.eq.s32.totalorder %s21, 0
    %p131 = por %p129, %p130
    %p132 = scmp.ne.s32.totalorder %s120, %s121
    %p133 = scmp.eq.s32.totalorder %s22, 1
    %p134 = por %p132, %p133
    %p136 = scmp.ne.s32.totalorder %s121, %s135
    %p137 = scmp.eq.s32.totalorder %s22, 0
    %p138 = por %p136, %p137
    %s140 = sadd.s32 %s139, 1
    %p143 = scmp.eq.s32.totalorder %s16, 1
    %p144 = scmp.ne.s32.totalorder %s139, %s141
    %p145 = scmp.eq.s32.totalorder %s16, 0
    %p146 = por %p144, %p145
    %p147 = scmp.ne.s32.totalorder %s139, %s141
    %p148 = scmp.eq.s32.totalorder %s21, 1
    %p149 = por %p147, %p148
    %p150 = scmp.ne.s32.totalorder %s141, %s142
    %p151 = scmp.eq.s32.totalorder %s21, 0
    %p152 = por %p150, %p151
    %p153 = scmp.ne.s32.totalorder %s141, %s142
    %p154 = scmp.eq.s32.totalorder %s22, 1
    %p155 = por %p153, %p154
    %p157 = scmp.ne.s32.totalorder %s142, %s156
    %p158 = scmp.eq.s32.totalorder %s22, 0
    %p159 = por %p157, %p158
    %s161 = sadd.s32 %s160, 1
    %p164 = scmp.eq.s32.totalorder %s16, 1
    %p165 = scmp.ne.s32.totalorder %s160, %s162
    %p166 = scmp.eq.s32.totalorder %s16, 0
    %p167 = por %p165, %p166
    %p168 = scmp.ne.s32.totalorder %s160, %s162
    %p169 = scmp.eq.s32.totalorder %s21, 1
    %p170 = por %p168, %p169
    %p171 = scmp.ne.s32.totalorder %s162, %s163
    %p172 = scmp.eq.s32.totalorder %s21, 0
    %p173 = por %p171, %p172
    %p174 = scmp.ne.s32.totalorder %s162, %s163
    %p175 = scmp.eq.s32.totalorder %s22, 1
    %p176 = por %p174, %p175
    %p178 = scmp.ne.s32.totalorder %s163, %s177
    %p179 = scmp.eq.s32.totalorder %s22, 0
    %p180 = por %p178, %p179
    %s182 = sadd.s32 %s181, 1
    %p185 = scmp.eq.s32.totalorder %s16, 1
    %p186 = scmp.ne.s32.totalorder %s181, %s183
    %p187 = scmp.eq.s32.totalorder %s16, 0
    %p188 = por %p186, %p187
    %p189 = scmp.ne.s32.totalorder %s181, %s183
    %p190 = scmp.eq.s32.totalorder %s21, 1
    %p191 = por %p189, %p190
    %p192 = scmp.ne.s32.totalorder %s183, %s184
    %p193 = scmp.eq.s32.totalorder %s21, 0
    %p194 = por %p192, %p193
    %p195 = scmp.ne.s32.totalorder %s183, %s184
    %p196 = scmp.eq.s32.totalorder %s22, 1
    %p197 = por %p195, %p196
    %p199 = scmp.ne.s32.totalorder %s184, %s198
    %p200 = scmp.eq.s32.totalorder %s22, 0
    %p201 = por %p199, %p200
    %s203 = sadd.s32 %s202, 1
    %p206 = scmp.eq.s32.totalorder %s16, 1
    %p207 = scmp.ne.s32.totalorder %s202, %s204
    %p208 = scmp.eq.s32.totalorder %s16, 0
    %p209 = por %p207, %p208
    %p210 = scmp.ne.s32.totalorder %s202, %s204
    %p211 = scmp.eq.s32.totalorder %s21, 1
    %p212 = por %p210, %p211
    %p213 = scmp.ne.s32.totalorder %s204, %s205
    %p214 = scmp.eq.s32.totalorder %s21, 0
    %p215 = por %p213, %p214
    %p216 = scmp.ne.s32.totalorder %s204, %s205
    %p217 = scmp.eq.s32.totalorder %s22, 1
    %p218 = por %p216, %p217
    %p220 = scmp.ne.s32.totalorder %s205, %s219
    %p221 = scmp.eq.s32.totalorder %s22, 0
    %p222 = por %p220, %p221
    %s224 = sadd.s32 %s223, 1
    %p227 = scmp.eq.s32.totalorder %s16, 1
    %p228 = scmp.ne.s32.totalorder %s223, %s225
    %p229 = scmp.eq.s32.totalorder %s16, 0
    %p230 = por %p228, %p229
    %p231 = scmp.ne.s32.totalorder %s223, %s225
    %p232 = scmp.eq.s32.totalorder %s21, 1
    %p233 = por %p231, %p232
    %p234 = scmp.ne.s32.totalorder %s225, %s226
    %p235 = scmp.eq.s32.totalorder %s21, 0
    %p236 = por %p234, %p235
    %p237 = scmp.ne.s32.totalorder %s225, %s226
    %p238 = scmp.eq.s32.totalorder %s22, 1
    %p239 = por %p237, %p238
    %p241 = scmp.ne.s32.totalorder %s226, %s240
    %p242 = scmp.eq.s32.totalorder %s22, 0
    %p243 = por %p241, %p242
    %s244 = ssub.s32 %s16, %s23
    %p245 = scmp.eq.s32.totalorder %s244, 0
    %s247 = sadd.s32 %s246, 1
    %s248 = scalar_select %p245, %s246, %s247
    %p251 = pneg %p245
    %p252 = scmp.eq.s32.totalorder %s16, 1
    %p253 = por %p251, %p252
    %p254 = scmp.ne.s32.totalorder %s246, %s249
    %p255 = scmp.eq.s32.totalorder %s16, 0
    %p256 = por %p254, %p255
    %p257 = scmp.ne.s32.totalorder %s246, %s249
    %p258 = scmp.eq.s32.totalorder %s21, 1
    %p259 = por %p257, %p258
    %p260 = scmp.ne.s32.totalorder %s249, %s250
    %p261 = scmp.eq.s32.totalorder %s21, 0
    %p262 = por %p260, %p261
    %p263 = scmp.ne.s32.totalorder %s249, %s250
    %p264 = scmp.eq.s32.totalorder %s22, 1
    %p265 = por %p263, %p264
    %p267 = scmp.ne.s32.totalorder %s250, %s266
    %p268 = scmp.eq.s32.totalorder %s22, 0
    %p269 = por %p267, %p268
    %p270 = scmp.le.s32.totalorder 1, %s16
    %p271 = scmp.lt.s32.totalorder %s16, 3
    %p272 = pnand %p270, %p271
    %p273 = pneg %p272
    // Predicated region
    $region9: #{_forward_core.1} parent=5 // pred_check
      _
    $region10: #{_forward_core.1} parent=5 // pred_check_branch
      %275 = sbr.rel (%p272) target = $region12
    $region11: #{_forward_core.1} parent=5 // pred_region
      %s276 = ssub.s32 %s16, 1
      // Predicated region
      $region13: #{_forward_core.1} parent=11 // pred_check
        %p277 = pneg %p89
      $region14: #{_forward_core.1} parent=11 // pred_check_branch
        %279 = sbr.rel (%p277) target = $region16
      $region15: #{_forward_core.1} parent=11 // pred_region
        _
      $region16: #{_forward_core.1} parent=11 // pred_fallthru
        _
      // Predicated region
      $region17: #{_forward_core.1} parent=11 // pred_check
        %p280 = pneg %p110
      $region18: #{_forward_core.1} parent=11 // pred_check_branch
        %282 = sbr.rel (%p280) target = $region20
      $region19: #{_forward_core.1} parent=11 // pred_region
        _
      $region20: #{_forward_core.1} parent=11 // pred_fallthru
        _
      // Predicated region
      $region21: #{_forward_core.1} parent=11 // pred_check
        %p283 = pneg %p131
      $region22: #{_forward_core.1} parent=11 // pred_check_branch
        %285 = sbr.rel (%p283) target = $region24
      $region23: #{_forward_core.1} parent=11 // pred_region
        _
      $region24: #{_forward_core.1} parent=11 // pred_fallthru
        _
      // Predicated region
      $region25: #{_forward_core.1} parent=11 // pred_check
        %p286 = pneg %p152
      $region26: #{_forward_core.1} parent=11 // pred_check_branch
        %288 = sbr.rel (%p286) target = $region28
      $region27: #{_forward_core.1} parent=11 // pred_region
        _
      $region28: #{_forward_core.1} parent=11 // pred_fallthru
        _
      // Predicated region
      $region29: #{_forward_core.1} parent=11 // pred_check
        %p289 = pneg %p173
      $region30: #{_forward_core.1} parent=11 // pred_check_branch
        %291 = sbr.rel (%p289) target = $region32
      $region31: #{_forward_core.1} parent=11 // pred_region
        _
      $region32: #{_forward_core.1} parent=11 // pred_fallthru
        _
      // Predicated region
      $region33: #{_forward_core.1} parent=11 // pred_check
        %p292 = pneg %p194
      $region34: #{_forward_core.1} parent=11 // pred_check_branch
        %294 = sbr.rel (%p292) target = $region36
      $region35: #{_forward_core.1} parent=11 // pred_region
        _
      $region36: #{_forward_core.1} parent=11 // pred_fallthru
        _
      // Predicated region
      $region37: #{_forward_core.1} parent=11 // pred_check
        %p295 = pneg %p215
      $region38: #{_forward_core.1} parent=11 // pred_check_branch
        %297 = sbr.rel (%p295) target = $region40
      $region39: #{_forward_core.1} parent=11 // pred_region
        _
      $region40: #{_forward_core.1} parent=11 // pred_fallthru
        _
      // Predicated region
      $region41: #{_forward_core.1} parent=11 // pred_check
        %p298 = pneg %p236
      $region42: #{_forward_core.1} parent=11 // pred_check_branch
        %300 = sbr.rel (%p298) target = $region44
      $region43: #{_forward_core.1} parent=11 // pred_region
        _
      $region44: #{_forward_core.1} parent=11 // pred_fallthru
        _
    $region12: #{_forward_core.1} parent=5 // pred_fallthru
      _
    %p301 = scmp.lt.s32.totalorder %s16, 2
    // Predicated region
    $region45: #{_forward_core.1} parent=5 // pred_check
      %p302 = pneg %p301
    $region46: #{_forward_core.1} parent=5 // pred_check_branch
      %304 = sbr.rel (%p302) target = $region48
    $region47: #{_forward_core.1} parent=5 // pred_region
      // Predicated region
      $region49: #{_forward_core.1} parent=47 // pred_check
        %p305 = pneg %p36
      $region50: #{_forward_core.1} parent=47 // pred_check_branch
        %307 = sbr.rel (%p305) target = $region52
      $region51: #{_forward_core.1} parent=47 // pred_region
        %p308 = scmp.lt.s32.totalorder %s16, 1
        %s309 = scalar_select %p308, %s16, 1
        %s310 = smul.addr %s309, 8
        %s311 = smul.addr %s310, 8
        %s312 = scalar_lea.vmem %s0, %s311
      $region52: #{_forward_core.1} parent=47 // pred_fallthru
        _
      // Predicated region
      $region53: #{_forward_core.1} parent=47 // pred_check
        %p313 = pneg %p62
      $region54: #{_forward_core.1} parent=47 // pred_check_branch
        %315 = sbr.rel (%p313) target = $region56
      $region55: #{_forward_core.1} parent=47 // pred_region
        %p316 = scmp.lt.s32.totalorder %s16, 1
        %s317 = scalar_select %p316, %s16, 1
        %s318 = smul.addr %s317, 8
        %s319 = smul.addr %s318, 8
        %s320 = scalar_lea.vmem %s1, %s319
      $region56: #{_forward_core.1} parent=47 // pred_fallthru
        _
    $region48: #{_forward_core.1} parent=5 // pred_fallthru
      _
    %p321 = scmp.le.s32.totalorder 1, %s16
    %p322 = scmp.lt.s32.totalorder %s16, 3
    %p323 = pnand %p321, %p322
    %p324 = pneg %p323
    // Predicated region
    $region57: #{_forward_core.1} parent=5 // pred_check
      _
    $region58: #{_forward_core.1} parent=5 // pred_check_branch
      %326 = sbr.rel (%p323) target = $region60
    $region59: #{_forward_core.1} parent=5 // pred_region
      %s327 = ssub.s32 %s16, 1
      %p328 = scmp.lt.s32.totalorder %s21, 1
      %s329 = scalar_select %p328, %s21, 1
      %s330 = smul.addr %s329, 8
      %s331 = smul.addr %s330, 8
      %s332 = scalar_lea.vmem %s0, %s331
      %p333 = pneg %p42
      %p334 = pneg %p39
      %p335 = scmp.lt.s32.totalorder %s21, 1
      %s336 = scalar_select %p335, %s21, 1
      %s337 = smul.addr %s336, 8
      %s338 = smul.addr %s337, 8
      %s339 = scalar_lea.vmem %s1, %s338
      %p340 = pneg %p68
      %p341 = pneg %p65
      %p342 = pneg %p89
      %p343 = pneg %p86
      %p344 = pneg %p110
      %p345 = pneg %p107
      %p346 = pneg %p131
      %p347 = pneg %p128
      %p348 = pneg %p152
      %p349 = pneg %p149
      %p350 = pneg %p173
      %p351 = pneg %p170
      %p352 = pneg %p194
      %p353 = pneg %p191
      %p354 = pneg %p215
      %p355 = pneg %p212
      %p356 = pneg %p236
      %p357 = pneg %p233
      %p358 = pneg %p262
      %p359 = pneg %p259
      %p360 = scmp.lt.s32.totalorder %s21, 1
      %s361 = scalar_select %p360, %s21, 1
      %s362 = smul.addr %s361, 8
      %s363 = smul.addr %s362, 8
      %s364 = scalar_lea.vmem %s10, %s363
      %p365 = scmp.lt.s32.totalorder %s21, 1
      %s366 = scalar_select %p365, %s21, 1
      %s367 = smul.addr %s366, 8
      %s368 = smul.addr %s367, 8
      %s369 = scalar_lea.vmem %s0, %s368
      %p370 = scmp.lt.s32.totalorder %s21, 1
      %s371 = scalar_select %p370, %s21, 1
      %s372 = smul.addr %s371, 8
      %s373 = smul.addr %s372, 8
      %s374 = scalar_lea.vmem %s1, %s373
      %p375 = scmp.lt.s32.totalorder %s21, 1
      %s376 = scalar_select %p375, %s21, 1
      %s377 = smul.addr %s376, 8
      %s378 = smul.addr %s377, 8
      %s379 = scalar_lea.vmem %s10, %s378
      %380 = vst [vmem:[#allocation2] sm:$0xff] 0.0
      %381 = vst [vmem:[#allocation2 + $0x8] sm:$0xff] 0.0
      %382 = vst [vmem:[#allocation2 + $0x50] sm:$0xff] 0.0
      %383 = vst [vmem:[#allocation2 + $0x58] sm:$0xff] 0.0
      %v384 = vld [vmem:[%s369] sm:$0xff]
      %v385 = vld [vmem:[%s369 + $0x8] sm:$0xff]
      %v386 = vld [vmem:[%s369 + $0x10] sm:$0xff]
      %v387 = vld [vmem:[%s369 + $0x18] sm:$0xff]
      %v388 = vld [vmem:[%s369 + $0x20] sm:$0xff]
      %v389 = vld [vmem:[%s369 + $0x28] sm:$0xff]
      %v390 = vld [vmem:[%s369 + $0x30] sm:$0xff]
      %v391 = vld [vmem:[%s369 + $0x38] sm:$0xff]
      %v392 = vld [vmem:[%s2] sm:$0xff]
      %v393 = vld [vmem:[%s2 + $0x8] sm:$0xff]
      %v394 = vld [vmem:[%s2 + $0x10] sm:$0xff]
      %v395 = vld [vmem:[%s2 + $0x18] sm:$0xff]
      %v396 = vld [vmem:[%s2 + $0x20] sm:$0xff]
      %v397 = vld [vmem:[%s2 + $0x28] sm:$0xff]
      %v398 = vld [vmem:[%s2 + $0x30] sm:$0xff]
      %v399 = vld [vmem:[%s2 + $0x38] sm:$0xff]
      %v400 = vld [vmem:[%s2 + $0x40] sm:$0xff]
      %v401 = vld [vmem:[%s2 + $0x48] sm:$0xff]
      %v402 = vld [vmem:[%s2 + $0x50] sm:$0xff]
      %v403 = vld [vmem:[%s2 + $0x58] sm:$0xff]
      %v404 = vld [vmem:[%s2 + $0x60] sm:$0xff]
      %v405 = vld [vmem:[%s2 + $0x68] sm:$0xff]
      %v406 = vld [vmem:[%s2 + $0x70] sm:$0xff]
      %v407 = vld [vmem:[%s2 + $0x78] sm:$0xff]
      %v408 = vld [vmem:[%s3] sm:$0x1]
      %v410 = vlaneseq
      %v411 = vshrl.u32 %v410, 7
      %v412 = vsub.s32 0, %v411
      %v413 = vrot.slane %v408, %v412
      %415 = vmatprep.subr.mxu0 0.0
      %416 = vmatpush1.msra.mxu0 %v407
      %417 = vmatprep.subr.mxu0 0.0
      %418 = vmatpush1.msra.mxu0 %v406
      %419 = vmatprep.subr.mxu0 0.0
      %420 = vmatpush1.msra.mxu0 %v405
      %421 = vmatprep.subr.mxu0 0.0
      %422 = vmatpush1.msra.mxu0 %v404
      %423 = vmatprep.subr.mxu0 0.0
      %424 = vmatpush1.msra.mxu0 %v403
      %425 = vmatprep.subr.mxu0 0.0
      %426 = vmatpush1.msra.mxu0 %v402
      %427 = vmatprep.subr.mxu0 0.0
      %428 = vmatpush1.msra.mxu0 %v401
      %429 = vmatprep.subr.mxu0 0.0
      %430 = vmatpush1.msra.mxu0 %v400
      %431 = vmatprep.subr.mxu0 0.0
      %432 = vmatpush1.msra.mxu0 %v399
      %433 = vmatprep.subr.mxu0 0.0
      %434 = vmatpush1.msra.mxu0 %v398
      %435 = vmatprep.subr.mxu0 0.0
      %436 = vmatpush1.msra.mxu0 %v397
      %437 = vmatprep.subr.mxu0 0.0
      %438 = vmatpush1.msra.mxu0 %v396
      %439 = vmatprep.subr.mxu0 0.0
      %440 = vmatpush1.msra.mxu0 %v395
      %441 = vmatprep.subr.mxu0 0.0
      %442 = vmatpush1.msra.mxu0 %v394
      %443 = vmatprep.subr.mxu0 0.0
      %444 = vmatpush1.msra.mxu0 %v393
      %445 = vmatprep.subr.mxu0 0.0
      %446 = vmatpush1.msra.mxu0 %v392
      %447 = vmatprep.subr.mxu0 0.0
      %448 = vmatpush2.msra.mxu0 0.0
      %449 = vmatprep.subr.mxu0 0.0
      %450 = vmatpush2.msra.mxu0 0.0
      %451 = vmatprep.subr.mxu0 0.0
      %452 = vmatpush2.msra.mxu0 0.0
      %453 = vmatprep.subr.mxu0 0.0
      %454 = vmatpush2.msra.mxu0 0.0
      %455 = vmatprep.subr.mxu0 0.0
      %456 = vmatpush2.msra.mxu0 0.0
      %457 = vmatprep.subr.mxu0 0.0
      %458 = vmatpush2.msra.mxu0 0.0
      %459 = vmatprep.subr.mxu0 0.0
      %460 = vmatpush2.msra.mxu0 0.0
      %461 = vmatprep.subr.mxu0 0.0
      %462 = vmatpush2.msra.mxu0 0.0
      %463 = vmatprep.subr.mxu0 0.0
      %464 = vmatpush2.msra.mxu0 0.0
      %465 = vmatprep.subr.mxu0 0.0
      %466 = vmatpush2.msra.mxu0 0.0
      %467 = vmatprep.subr.mxu0 0.0
      %468 = vmatpush2.msra.mxu0 0.0
      %469 = vmatprep.subr.mxu0 0.0
      %470 = vmatpush2.msra.mxu0 0.0
      %471 = vmatprep.subr.mxu0 0.0
      %472 = vmatpush2.msra.mxu0 0.0
      %473 = vmatprep.subr.mxu0 0.0
      %474 = vmatpush2.msra.mxu0 0.0
      %475 = vmatprep.subr.mxu0 0.0
      %476 = vmatpush2.msra.mxu0 0.0
      %477 = vmatprep.subr.mxu0 0.0
      %478 = vmatpush2.msra.mxu0 0.0
      %479 = vmatprep.mubr.f32.mxu0 0.0
      %480 = vmatmul.mubr.f32.gmra.mxu0 %v384
      %v481 = vpop.f32.mrf.mxu0
      %v482 = vadd.f32 %v413, %v481
      %v483 = vpop.f32.mrf.mxu0
      %484 = vmatprep.mubr.f32.mxu0 0.0
      %485 = vmatmul.mubr.f32.gmra.mxu0 %v385
      %v486 = vpop.f32.mrf.mxu0
      %v487 = vadd.f32 %v413, %v486
      %v488 = vpop.f32.mrf.mxu0
      %489 = vmatprep.mubr.f32.mxu0 0.0
      %490 = vmatmul.mubr.f32.gmra.mxu0 %v386
      %v491 = vpop.f32.mrf.mxu0
      %v492 = vadd.f32 %v413, %v491
      %v493 = vpop.f32.mrf.mxu0
      %494 = vmatprep.mubr.f32.mxu0 0.0
      %495 = vmatmul.mubr.f32.gmra.mxu0 %v387
      %v496 = vpop.f32.mrf.mxu0
      %v497 = vadd.f32 %v413, %v496
      %v498 = vpop.f32.mrf.mxu0
      %499 = vmatprep.mubr.f32.mxu0 0.0
      %500 = vmatmul.mubr.f32.gmra.mxu0 %v388
      %v501 = vpop.f32.mrf.mxu0
      %v502 = vadd.f32 %v413, %v501
      %v503 = vpop.f32.mrf.mxu0
      %504 = vmatprep.mubr.f32.mxu0 0.0
      %505 = vmatmul.mubr.f32.gmra.mxu0 %v389
      %v506 = vpop.f32.mrf.mxu0
      %v507 = vadd.f32 %v413, %v506
      %v508 = vpop.f32.mrf.mxu0
      %509 = vmatprep.mubr.f32.mxu0 0.0
      %510 = vmatmul.mubr.f32.gmra.mxu0 %v390
      %v511 = vpop.f32.mrf.mxu0
      %v512 = vadd.f32 %v413, %v511
      %v513 = vpop.f32.mrf.mxu0
      %514 = vmatprep.mubr.f32.mxu0 0.0
      %515 = vmatmul.mubr.f32.gmra.mxu0 %v391
      %v516 = vpop.f32.mrf.mxu0
      %v517 = vadd.f32 %v413, %v516
      %v518 = vpop.f32.mrf.mxu0
      %519 = vdwg.mxu0
      %vm520 = vcmp.ge.f32.partialorder %v482, 0.0
      %vm521 = vcmp.ge.f32.partialorder %v487, 0.0
      %vm522 = vcmp.ge.f32.partialorder %v492, 0.0
      %vm523 = vcmp.ge.f32.partialorder %v497, 0.0
      %vm524 = vcmp.ge.f32.partialorder %v502, 0.0
      %vm525 = vcmp.ge.f32.partialorder %v507, 0.0
      %vm526 = vcmp.ge.f32.partialorder %v512, 0.0
      %vm527 = vcmp.ge.f32.partialorder %v517, 0.0
      %v528 = vmul.f32 %v482, 0.01
      %v529 = vmul.f32 %v487, 0.01
      %v530 = vmul.f32 %v492, 0.01
      %v531 = vmul.f32 %v497, 0.01
      %v532 = vmul.f32 %v502, 0.01
      %v533 = vmul.f32 %v507, 0.01
      %v534 = vmul.f32 %v512, 0.01
      %v535 = vmul.f32 %v517, 0.01
      %v536 = vsel %vm520, %v482, %v528
      %v537 = vsel %vm521, %v487, %v529
      %v538 = vsel %vm522, %v492, %v530
      %v539 = vsel %vm523, %v497, %v531
      %v540 = vsel %vm524, %v502, %v532
      %v541 = vsel %vm525, %v507, %v533
      %v542 = vsel %vm526, %v512, %v534
      %v543 = vsel %vm527, %v517, %v535
      %544 = vst [vmem:[#allocation2 + $0x10] sm:$0xff] %v536
      %545 = vst [vmem:[#allocation2 + $0x18] sm:$0xff] %v537
      %546 = vst [vmem:[#allocation2 + $0x20] sm:$0xff] %v538
      %547 = vst [vmem:[#allocation2 + $0x28] sm:$0xff] %v539
      %548 = vst [vmem:[#allocation2 + $0x30] sm:$0xff] %v540
      %549 = vst [vmem:[#allocation2 + $0x38] sm:$0xff] %v541
      %550 = vst [vmem:[#allocation2 + $0x40] sm:$0xff] %v542
      %551 = vst [vmem:[#allocation2 + $0x48] sm:$0xff] %v543
      %v552 = vlaneseq
      %v553 = vshrl.u32 %v552, 7
      %v554 = vadd.s32 %v553, 8
      %v555 = vadd.s32 %v553, 16
      %v556 = vadd.s32 %v553, 24
      %v557 = vadd.s32 %v553, 32
      %v558 = vadd.s32 %v553, 40
      %v559 = vadd.s32 %v553, 48
      %v560 = vadd.s32 %v553, 56
      %vm561 = vcmp.lt.s32.totalorder %v553, 0
      %v562 = vsub.s32 0, %v553
      %v563 = vsel %vm561, %v562, %v553
      %v564 = vshrl.u32 %v563, 3
      %v565 = vand.u32 %v563, 7
      %v566 = vsub.s32 0, %v565
      %v567 = vsel %vm561, %v566, %v565
      %vm568 = vcmp.lt.s32.totalorder %v554, 0
      %v569 = vsub.s32 0, %v554
      %v570 = vsel %vm568, %v569, %v554
      %v571 = vshrl.u32 %v570, 3
      %v572 = vand.u32 %v570, 7
      %v573 = vsub.s32 0, %v572
      %v574 = vsel %vm568, %v573, %v572
      %vm575 = vcmp.lt.s32.totalorder %v555, 0
      %v576 = vsub.s32 0, %v555
      %v577 = vsel %vm575, %v576, %v555
      %v578 = vshrl.u32 %v577, 3
      %v579 = vand.u32 %v577, 7
      %v580 = vsub.s32 0, %v579
      %v581 = vsel %vm575, %v580, %v579
      %vm582 = vcmp.lt.s32.totalorder %v556, 0
      %v583 = vsub.s32 0, %v556
      %v584 = vsel %vm582, %v583, %v556
      %v585 = vshrl.u32 %v584, 3
      %v586 = vand.u32 %v584, 7
      %v587 = vsub.s32 0, %v586
      %v588 = vsel %vm582, %v587, %v586
      %vm589 = vcmp.lt.s32.totalorder %v557, 0
      %v590 = vsub.s32 0, %v557
      %v591 = vsel %vm589, %v590, %v557
      %v592 = vshrl.u32 %v591, 3
      %v593 = vand.u32 %v591, 7
      %v594 = vsub.s32 0, %v593
      %v595 = vsel %vm589, %v594, %v593
      %vm596 = vcmp.lt.s32.totalorder %v558, 0
      %v597 = vsub.s32 0, %v558
      %v598 = vsel %vm596, %v597, %v558
      %v599 = vshrl.u32 %v598, 3
      %v600 = vand.u32 %v598, 7
      %v601 = vsub.s32 0, %v600
      %v602 = vsel %vm596, %v601, %v600
      %vm603 = vcmp.lt.s32.totalorder %v559, 0
      %v604 = vsub.s32 0, %v559
      %v605 = vsel %vm603, %v604, %v559
      %v606 = vshrl.u32 %v605, 3
      %v607 = vand.u32 %v605, 7
      %v608 = vsub.s32 0, %v607
      %v609 = vsel %vm603, %v608, %v607
      %vm610 = vcmp.lt.s32.totalorder %v560, 0
      %v611 = vsub.s32 0, %v560
      %v612 = vsel %vm610, %v611, %v560
      %v613 = vshrl.u32 %v612, 3
      %v614 = vand.u32 %v612, 7
      %v615 = vsub.s32 0, %v614
      %v616 = vsel %vm610, %v615, %v614
      %vm617 = vcmp.ne.s32.totalorder %v567, 0
      %vm618 = vcmp.ne.s32.totalorder %v574, 0
      %vm619 = vcmp.ne.s32.totalorder %v581, 0
      %vm620 = vcmp.ne.s32.totalorder %v588, 0
      %vm621 = vcmp.ne.s32.totalorder %v595, 0
      %vm622 = vcmp.ne.s32.totalorder %v602, 0
      %vm623 = vcmp.ne.s32.totalorder %v609, 0
      %vm624 = vcmp.ne.s32.totalorder %v616, 0
      %vm625 = vcmp.lt.s32.totalorder %v567, 0
      %vm626 = vcmp.lt.s32.totalorder %v574, 0
      %vm627 = vcmp.lt.s32.totalorder %v581, 0
      %vm628 = vcmp.lt.s32.totalorder %v588, 0
      %vm629 = vcmp.lt.s32.totalorder %v595, 0
      %vm630 = vcmp.lt.s32.totalorder %v602, 0
      %vm631 = vcmp.lt.s32.totalorder %v609, 0
      %vm632 = vcmp.lt.s32.totalorder %v616, 0
      %vm633 = vmand %vm625, %vm617
      %vm634 = vmand %vm626, %vm618
      %vm635 = vmand %vm627, %vm619
      %vm636 = vmand %vm628, %vm620
      %vm637 = vmand %vm629, %vm621
      %vm638 = vmand %vm630, %vm622
      %vm639 = vmand %vm631, %vm623
      %vm640 = vmand %vm632, %vm624
      %v641 = vadd.s32 %v567, 8
      %v642 = vadd.s32 %v574, 8
      %v643 = vadd.s32 %v581, 8
      %v644 = vadd.s32 %v588, 8
      %v645 = vadd.s32 %v595, 8
      %v646 = vadd.s32 %v602, 8
      %v647 = vadd.s32 %v609, 8
      %v648 = vadd.s32 %v616, 8
      %v649 = vsel %vm633, %v641, %v567
      %v650 = vsel %vm634, %v642, %v574
      %v651 = vsel %vm635, %v643, %v581
      %v652 = vsel %vm636, %v644, %v588
      %v653 = vsel %vm637, %v645, %v595
      %v654 = vsel %vm638, %v646, %v602
      %v655 = vsel %vm639, %v647, %v609
      %v656 = vsel %vm640, %v648, %v616
      %vm657 = vcmp.gt.s32.totalorder %v649, 0
      %vm658 = vcmp.gt.s32.totalorder %v650, 0
      %vm659 = vcmp.gt.s32.totalorder %v651, 0
      %vm660 = vcmp.gt.s32.totalorder %v652, 0
      %vm661 = vcmp.gt.s32.totalorder %v653, 0
      %vm662 = vcmp.gt.s32.totalorder %v654, 0
      %vm663 = vcmp.gt.s32.totalorder %v655, 0
      %vm664 = vcmp.gt.s32.totalorder %v656, 0
      %v665 = vsel %vm657, 1, 0
      %v666 = vsel %vm658, 1, 0
      %v667 = vsel %vm659, 1, 0
      %v668 = vsel %vm660, 1, 0
      %v669 = vsel %vm661, 1, 0
      %v670 = vsel %vm662, 1, 0
      %v671 = vsel %vm663, 1, 0
      %v672 = vsel %vm664, 1, 0
      %v673 = vcvt.s32.f32 %v665
      %v674 = vcvt.s32.f32 %v666
      %v675 = vcvt.s32.f32 %v667
      %v676 = vcvt.s32.f32 %v668
      %v677 = vcvt.s32.f32 %v669
      %v678 = vcvt.s32.f32 %v670
      %v679 = vcvt.s32.f32 %v671
      %v680 = vcvt.s32.f32 %v672
      %vm681 = vcmp.lt.s32.totalorder %v649, 7
      %vm682 = vcmp.lt.s32.totalorder %v650, 7
      %vm683 = vcmp.lt.s32.totalorder %v651, 7
      %vm684 = vcmp.lt.s32.totalorder %v652, 7
      %vm685 = vcmp.lt.s32.totalorder %v653, 7
      %vm686 = vcmp.lt.s32.totalorder %v654, 7
      %vm687 = vcmp.lt.s32.totalorder %v655, 7
      %vm688 = vcmp.lt.s32.totalorder %v656, 7
      %v689 = vsel %vm681, 1, 0
      %v690 = vsel %vm682, 1, 0
      %v691 = vsel %vm683, 1, 0
      %v692 = vsel %vm684, 1, 0
      %v693 = vsel %vm685, 1, 0
      %v694 = vsel %vm686, 1, 0
      %v695 = vsel %vm687, 1, 0
      %v696 = vsel %vm688, 1, 0
      %v697 = vcvt.s32.f32 %v689
      %v698 = vcvt.s32.f32 %v690
      %v699 = vcvt.s32.f32 %v691
      %v700 = vcvt.s32.f32 %v692
      %v701 = vcvt.s32.f32 %v693
      %v702 = vcvt.s32.f32 %v694
      %v703 = vcvt.s32.f32 %v695
      %v704 = vcvt.s32.f32 %v696
      %v705 = vld [vmem:[%s5] sm:$0x1]
      %v707 = vlaneseq
      %v708 = vshrl.u32 %v707, 7
      %v709 = vsub.s32 0, %v708
      %v710 = vrot.slane %v705, %v709
      %v712 = vadd.f32 %v710, 0.0
      %v713 = vld [vmem:[#allocation2 + $0x7] sm:$0xff]
      %v714 = vld [vmem:[#allocation2 + $0xf] sm:$0xff]
      %v715 = vld [vmem:[#allocation2 + $0x17] sm:$0xff]
      %v716 = vld [vmem:[#allocation2 + $0x1f] sm:$0xff]
      %v717 = vld [vmem:[#allocation2 + $0x27] sm:$0xff]
      %v718 = vld [vmem:[#allocation2 + $0x2f] sm:$0xff]
      %v719 = vld [vmem:[#allocation2 + $0x37] sm:$0xff]
      %v720 = vld [vmem:[#allocation2 + $0x3f] sm:$0xff]
      %v721 = vmul.f32 %v713, %v673
      %v722 = vmul.f32 %v714, %v674
      %v723 = vmul.f32 %v715, %v675
      %v724 = vmul.f32 %v716, %v676
      %v725 = vmul.f32 %v717, %v677
      %v726 = vmul.f32 %v718, %v678
      %v727 = vmul.f32 %v719, %v679
      %v728 = vmul.f32 %v720, %v680
      %v729 = vld [vmem:[%s4] sm:$0xff]
      %v730 = vld [vmem:[%s4 + $0x8] sm:$0xff]
      %v731 = vld [vmem:[%s4 + $0x10] sm:$0xff]
      %v732 = vld [vmem:[%s4 + $0x18] sm:$0xff]
      %v733 = vld [vmem:[%s4 + $0x20] sm:$0xff]
      %v734 = vld [vmem:[%s4 + $0x28] sm:$0xff]
      %v735 = vld [vmem:[%s4 + $0x30] sm:$0xff]
      %v736 = vld [vmem:[%s4 + $0x38] sm:$0xff]
      %v737 = vld [vmem:[%s4 + $0x40] sm:$0xff]
      %v738 = vld [vmem:[%s4 + $0x48] sm:$0xff]
      %v739 = vld [vmem:[%s4 + $0x50] sm:$0xff]
      %v740 = vld [vmem:[%s4 + $0x58] sm:$0xff]
      %v741 = vld [vmem:[%s4 + $0x60] sm:$0xff]
      %v742 = vld [vmem:[%s4 + $0x68] sm:$0xff]
      %v743 = vld [vmem:[%s4 + $0x70] sm:$0xff]
      %v744 = vld [vmem:[%s4 + $0x78] sm:$0xff]
      %745 = vmatprep.subr.mxu0 0.0
      %746 = vmatpush1.msra.mxu0 %v744
      %747 = vmatprep.subr.mxu0 0.0
      %748 = vmatpush1.msra.mxu0 %v743
      %749 = vmatprep.subr.mxu0 0.0
      %750 = vmatpush1.msra.mxu0 %v742
      %751 = vmatprep.subr.mxu0 0.0
      %752 = vmatpush1.msra.mxu0 %v741
      %753 = vmatprep.subr.mxu0 0.0
      %754 = vmatpush1.msra.mxu0 %v740
      %755 = vmatprep.subr.mxu0 0.0
      %756 = vmatpush1.msra.mxu0 %v739
      %757 = vmatprep.subr.mxu0 0.0
      %758 = vmatpush1.msra.mxu0 %v738
      %759 = vmatprep.subr.mxu0 0.0
      %760 = vmatpush1.msra.mxu0 %v737
      %761 = vmatprep.subr.mxu0 0.0
      %762 = vmatpush1.msra.mxu0 %v736
      %763 = vmatprep.subr.mxu0 0.0
      %764 = vmatpush1.msra.mxu0 %v735
      %765 = vmatprep.subr.mxu0 0.0
      %766 = vmatpush1.msra.mxu0 %v734
      %767 = vmatprep.subr.mxu0 0.0
      %768 = vmatpush1.msra.mxu0 %v733
      %769 = vmatprep.subr.mxu0 0.0
      %770 = vmatpush1.msra.mxu0 %v732
      %771 = vmatprep.subr.mxu0 0.0
      %772 = vmatpush1.msra.mxu0 %v731
      %773 = vmatprep.subr.mxu0 0.0
      %774 = vmatpush1.msra.mxu0 %v730
      %775 = vmatprep.subr.mxu0 0.0
      %776 = vmatpush1.msra.mxu0 %v729
      %777 = vmatprep.subr.mxu0 0.0
      %778 = vmatpush2.msra.mxu0 0.0
      %779 = vmatprep.subr.mxu0 0.0
      %780 = vmatpush2.msra.mxu0 0.0
      %781 = vmatprep.subr.mxu0 0.0
      %782 = vmatpush2.msra.mxu0 0.0
      %783 = vmatprep.subr.mxu0 0.0
      %784 = vmatpush2.msra.mxu0 0.0
      %785 = vmatprep.subr.mxu0 0.0
      %786 = vmatpush2.msra.mxu0 0.0
      %787 = vmatprep.subr.mxu0 0.0
      %788 = vmatpush2.msra.mxu0 0.0
      %789 = vmatprep.subr.mxu0 0.0
      %790 = vmatpush2.msra.mxu0 0.0
      %791 = vmatprep.subr.mxu0 0.0
      %792 = vmatpush2.msra.mxu0 0.0
      %793 = vmatprep.subr.mxu0 0.0
      %794 = vmatpush2.msra.mxu0 0.0
      %795 = vmatprep.subr.mxu0 0.0
      %796 = vmatpush2.msra.mxu0 0.0
      %797 = vmatprep.subr.mxu0 0.0
      %798 = vmatpush2.msra.mxu0 0.0
      %799 = vmatprep.subr.mxu0 0.0
      %800 = vmatpush2.msra.mxu0 0.0
      %801 = vmatprep.subr.mxu0 0.0
      %802 = vmatpush2.msra.mxu0 0.0
      %803 = vmatprep.subr.mxu0 0.0
      %804 = vmatpush2.msra.mxu0 0.0
      %805 = vmatprep.subr.mxu0 0.0
      %806 = vmatpush2.msra.mxu0 0.0
      %807 = vmatprep.subr.mxu0 0.0
      %808 = vmatpush2.msra.mxu0 0.0
      %809 = vmatprep.mubr.f32.mxu0 0.0
      %810 = vmatmul.mubr.f32.gmra.mxu0 %v721
      %v811 = vpop.f32.mrf.mxu0
      %v812 = vadd.f32 0.0, %v811
      %v813 = vpop.f32.mrf.mxu0
      %814 = vmatprep.mubr.f32.mxu0 0.0
      %815 = vmatmul.mubr.f32.gmra.mxu0 %v722
      %v816 = vpop.f32.mrf.mxu0
      %v817 = vadd.f32 0.0, %v816
      %v818 = vpop.f32.mrf.mxu0
      %819 = vmatprep.mubr.f32.mxu0 0.0
      %820 = vmatmul.mubr.f32.gmra.mxu0 %v723
      %v821 = vpop.f32.mrf.mxu0
      %v822 = vadd.f32 0.0, %v821
      %v823 = vpop.f32.mrf.mxu0
      %824 = vmatprep.mubr.f32.mxu0 0.0
      %825 = vmatmul.mubr.f32.gmra.mxu0 %v724
      %v826 = vpop.f32.mrf.mxu0
      %v827 = vadd.f32 0.0, %v826
      %v828 = vpop.f32.mrf.mxu0
      %829 = vmatprep.mubr.f32.mxu0 0.0
      %830 = vmatmul.mubr.f32.gmra.mxu0 %v725
      %v831 = vpop.f32.mrf.mxu0
      %v832 = vadd.f32 0.0, %v831
      %v833 = vpop.f32.mrf.mxu0
      %834 = vmatprep.mubr.f32.mxu0 0.0
      %835 = vmatmul.mubr.f32.gmra.mxu0 %v726
      %v836 = vpop.f32.mrf.mxu0
      %v837 = vadd.f32 0.0, %v836
      %v838 = vpop.f32.mrf.mxu0
      %839 = vmatprep.mubr.f32.mxu0 0.0
      %840 = vmatmul.mubr.f32.gmra.mxu0 %v727
      %v841 = vpop.f32.mrf.mxu0
      %v842 = vadd.f32 0.0, %v841
      %v843 = vpop.f32.mrf.mxu0
      %844 = vmatprep.mubr.f32.mxu0 0.0
      %845 = vmatmul.mubr.f32.gmra.mxu0 %v728
      %v846 = vpop.f32.mrf.mxu0
      %v847 = vadd.f32 0.0, %v846
      %v848 = vpop.f32.mrf.mxu0
      %849 = vdwg.mxu0
      %v850 = vadd.f32 %v712, %v812
      %v851 = vadd.f32 %v712, %v817
      %v852 = vadd.f32 %v712, %v822
      %v853 = vadd.f32 %v712, %v827
      %v854 = vadd.f32 %v712, %v832
      %v855 = vadd.f32 %v712, %v837
      %v856 = vadd.f32 %v712, %v842
      %v857 = vadd.f32 %v712, %v847
      %v858 = vld [vmem:[#allocation2 + $0x8] sm:$0xff]
      %v859 = vld [vmem:[#allocation2 + $0x10] sm:$0xff]
      %v860 = vld [vmem:[#allocation2 + $0x18] sm:$0xff]
      %v861 = vld [vmem:[#allocation2 + $0x20] sm:$0xff]
      %v862 = vld [vmem:[#allocation2 + $0x28] sm:$0xff]
      %v863 = vld [vmem:[#allocation2 + $0x30] sm:$0xff]
      %v864 = vld [vmem:[#allocation2 + $0x38] sm:$0xff]
      %v865 = vld [vmem:[#allocation2 + $0x40] sm:$0xff]
      %v866 = vld [vmem:[%s4 + $0x80] sm:$0xff]
      %v867 = vld [vmem:[%s4 + $0x88] sm:$0xff]
      %v868 = vld [vmem:[%s4 + $0x90] sm:$0xff]
      %v869 = vld [vmem:[%s4 + $0x98] sm:$0xff]
      %v870 = vld [vmem:[%s4 + $0xa0] sm:$0xff]
      %v871 = vld [vmem:[%s4 + $0xa8] sm:$0xff]
      %v872 = vld [vmem:[%s4 + $0xb0] sm:$0xff]
      %v873 = vld [vmem:[%s4 + $0xb8] sm:$0xff]
      %v874 = vld [vmem:[%s4 + $0xc0] sm:$0xff]
      %v875 = vld [vmem:[%s4 + $0xc8] sm:$0xff]
      %v876 = vld [vmem:[%s4 + $0xd0] sm:$0xff]
      %v877 = vld [vmem:[%s4 + $0xd8] sm:$0xff]
      %v878 = vld [vmem:[%s4 + $0xe0] sm:$0xff]
      %v879 = vld [vmem:[%s4 + $0xe8] sm:$0xff]
      %v880 = vld [vmem:[%s4 + $0xf0] sm:$0xff]
      %v881 = vld [vmem:[%s4 + $0xf8] sm:$0xff]
      %882 = vmatprep.subr.mxu0 0.0
      %883 = vmatpush1.msra.mxu0 %v881
      %884 = vmatprep.subr.mxu0 0.0
      %885 = vmatpush1.msra.mxu0 %v880
      %886 = vmatprep.subr.mxu0 0.0
      %887 = vmatpush1.msra.mxu0 %v879
      %888 = vmatprep.subr.mxu0 0.0
      %889 = vmatpush1.msra.mxu0 %v878
      %890 = vmatprep.subr.mxu0 0.0
      %891 = vmatpush1.msra.mxu0 %v877
      %892 = vmatprep.subr.mxu0 0.0
      %893 = vmatpush1.msra.mxu0 %v876
      %894 = vmatprep.subr.mxu0 0.0
      %895 = vmatpush1.msra.mxu0 %v875
      %896 = vmatprep.subr.mxu0 0.0
      %897 = vmatpush1.msra.mxu0 %v874
      %898 = vmatprep.subr.mxu0 0.0
      %899 = vmatpush1.msra.mxu0 %v873
      %900 = vmatprep.subr.mxu0 0.0
      %901 = vmatpush1.msra.mxu0 %v872
      %902 = vmatprep.subr.mxu0 0.0
      %903 = vmatpush1.msra.mxu0 %v871
      %904 = vmatprep.subr.mxu0 0.0
      %905 = vmatpush1.msra.mxu0 %v870
      %906 = vmatprep.subr.mxu0 0.0
      %907 = vmatpush1.msra.mxu0 %v869
      %908 = vmatprep.subr.mxu0 0.0
      %909 = vmatpush1.msra.mxu0 %v868
      %910 = vmatprep.subr.mxu0 0.0
      %911 = vmatpush1.msra.mxu0 %v867
      %912 = vmatprep.subr.mxu0 0.0
      %913 = vmatpush1.msra.mxu0 %v866
      %914 = vmatprep.subr.mxu0 0.0
      %915 = vmatpush2.msra.mxu0 0.0
      %916 = vmatprep.subr.mxu0 0.0
      %917 = vmatpush2.msra.mxu0 0.0
      %918 = vmatprep.subr.mxu0 0.0
      %919 = vmatpush2.msra.mxu0 0.0
      %920 = vmatprep.subr.mxu0 0.0
      %921 = vmatpush2.msra.mxu0 0.0
      %922 = vmatprep.subr.mxu0 0.0
      %923 = vmatpush2.msra.mxu0 0.0
      %924 = vmatprep.subr.mxu0 0.0
      %925 = vmatpush2.msra.mxu0 0.0
      %926 = vmatprep.subr.mxu0 0.0
      %927 = vmatpush2.msra.mxu0 0.0
      %928 = vmatprep.subr.mxu0 0.0
      %929 = vmatpush2.msra.mxu0 0.0
      %930 = vmatprep.subr.mxu0 0.0
      %931 = vmatpush2.msra.mxu0 0.0
      %932 = vmatprep.subr.mxu0 0.0
      %933 = vmatpush2.msra.mxu0 0.0
      %934 = vmatprep.subr.mxu0 0.0
      %935 = vmatpush2.msra.mxu0 0.0
      %936 = vmatprep.subr.mxu0 0.0
      %937 = vmatpush2.msra.mxu0 0.0
      %938 = vmatprep.subr.mxu0 0.0
      %939 = vmatpush2.msra.mxu0 0.0
      %940 = vmatprep.subr.mxu0 0.0
      %941 = vmatpush2.msra.mxu0 0.0
      %942 = vmatprep.subr.mxu0 0.0
      %943 = vmatpush2.msra.mxu0 0.0
      %944 = vmatprep.subr.mxu0 0.0
      %945 = vmatpush2.msra.mxu0 0.0
      %946 = vmatprep.mubr.f32.mxu0 0.0
      %947 = vmatmul.mubr.f32.gmra.mxu0 %v858
      %v948 = vpop.f32.mrf.mxu0
      %v949 = vadd.f32 0.0, %v948
      %v950 = vpop.f32.mrf.mxu0
      %951 = vmatprep.mubr.f32.mxu0 0.0
      %952 = vmatmul.mubr.f32.gmra.mxu0 %v859
      %v953 = vpop.f32.mrf.mxu0
      %v954 = vadd.f32 0.0, %v953
      %v955 = vpop.f32.mrf.mxu0
      %956 = vmatprep.mubr.f32.mxu0 0.0
      %957 = vmatmul.mubr.f32.gmra.mxu0 %v860
      %v958 = vpop.f32.mrf.mxu0
      %v959 = vadd.f32 0.0, %v958
      %v960 = vpop.f32.mrf.mxu0
      %961 = vmatprep.mubr.f32.mxu0 0.0
      %962 = vmatmul.mubr.f32.gmra.mxu0 %v861
      %v963 = vpop.f32.mrf.mxu0
      %v964 = vadd.f32 0.0, %v963
      %v965 = vpop.f32.mrf.mxu0
      %966 = vmatprep.mubr.f32.mxu0 0.0
      %967 = vmatmul.mubr.f32.gmra.mxu0 %v862
      %v968 = vpop.f32.mrf.mxu0
      %v969 = vadd.f32 0.0, %v968
      %v970 = vpop.f32.mrf.mxu0
      %971 = vmatprep.mubr.f32.mxu0 0.0
      %972 = vmatmul.mubr.f32.gmra.mxu0 %v863
      %v973 = vpop.f32.mrf.mxu0
      %v974 = vadd.f32 0.0, %v973
      %v975 = vpop.f32.mrf.mxu0
      %976 = vmatprep.mubr.f32.mxu0 0.0
      %977 = vmatmul.mubr.f32.gmra.mxu0 %v864
      %v978 = vpop.f32.mrf.mxu0
      %v979 = vadd.f32 0.0, %v978
      %v980 = vpop.f32.mrf.mxu0
      %981 = vmatprep.mubr.f32.mxu0 0.0
      %982 = vmatmul.mubr.f32.gmra.mxu0 %v865
      %v983 = vpop.f32.mrf.mxu0
      %v984 = vadd.f32 0.0, %v983
      %v985 = vpop.f32.mrf.mxu0
      %986 = vdwg.mxu0
      %v987 = vadd.f32 %v850, %v949
      %v988 = vadd.f32 %v851, %v954
      %v989 = vadd.f32 %v852, %v959
      %v990 = vadd.f32 %v853, %v964
      %v991 = vadd.f32 %v854, %v969
      %v992 = vadd.f32 %v855, %v974
      %v993 = vadd.f32 %v856, %v979
      %v994 = vadd.f32 %v857, %v984
      %v995 = vld [vmem:[#allocation2 + $0x9] sm:$0xff]
      %v996 = vld [vmem:[#allocation2 + $0x11] sm:$0xff]
      %v997 = vld [vmem:[#allocation2 + $0x19] sm:$0xff]
      %v998 = vld [vmem:[#allocation2 + $0x21] sm:$0xff]
      %v999 = vld [vmem:[#allocation2 + $0x29] sm:$0xff]
      %v1000 = vld [vmem:[#allocation2 + $0x31] sm:$0xff]
      %v1001 = vld [vmem:[#allocation2 + $0x39] sm:$0xff]
      %v1002 = vld [vmem:[#allocation2 + $0x41] sm:$0xff]
      %v1003 = vmul.f32 %v995, %v697
      %v1004 = vmul.f32 %v996, %v698
      %v1005 = vmul.f32 %v997, %v699
      %v1006 = vmul.f32 %v998, %v700
      %v1007 = vmul.f32 %v999, %v701
      %v1008 = vmul.f32 %v1000, %v702
      %v1009 = vmul.f32 %v1001, %v703
      %v1010 = vmul.f32 %v1002, %v704
      %v1011 = vld [vmem:[%s4 + $0x100] sm:$0xff]
      %v1012 = vld [vmem:[%s4 + $0x108] sm:$0xff]
      %v1013 = vld [vmem:[%s4 + $0x110] sm:$0xff]
      %v1014 = vld [vmem:[%s4 + $0x118] sm:$0xff]
      %v1015 = vld [vmem:[%s4 + $0x120] sm:$0xff]
      %v1016 = vld [vmem:[%s4 + $0x128] sm:$0xff]
      %v1017 = vld [vmem:[%s4 + $0x130] sm:$0xff]
      %v1018 = vld [vmem:[%s4 + $0x138] sm:$0xff]
      %v1019 = vld [vmem:[%s4 + $0x140] sm:$0xff]
      %v1020 = vld [vmem:[%s4 + $0x148] sm:$0xff]
      %v1021 = vld [vmem:[%s4 + $0x150] sm:$0xff]
      %v1022 = vld [vmem:[%s4 + $0x158] sm:$0xff]
      %v1023 = vld [vmem:[%s4 + $0x160] sm:$0xff]
      %v1024 = vld [vmem:[%s4 + $0x168] sm:$0xff]
      %v1025 = vld [vmem:[%s4 + $0x170] sm:$0xff]
      %v1026 = vld [vmem:[%s4 + $0x178] sm:$0xff]
      %1027 = vmatprep.subr.mxu0 0.0
      %1028 = vmatpush1.msra.mxu0 %v1026
      %1029 = vmatprep.subr.mxu0 0.0
      %1030 = vmatpush1.msra.mxu0 %v1025
      %1031 = vmatprep.subr.mxu0 0.0
      %1032 = vmatpush1.msra.mxu0 %v1024
      %1033 = vmatprep.subr.mxu0 0.0
      %1034 = vmatpush1.msra.mxu0 %v1023
      %1035 = vmatprep.subr.mxu0 0.0
      %1036 = vmatpush1.msra.mxu0 %v1022
      %1037 = vmatprep.subr.mxu0 0.0
      %1038 = vmatpush1.msra.mxu0 %v1021
      %1039 = vmatprep.subr.mxu0 0.0
      %1040 = vmatpush1.msra.mxu0 %v1020
      %1041 = vmatprep.subr.mxu0 0.0
      %1042 = vmatpush1.msra.mxu0 %v1019
      %1043 = vmatprep.subr.mxu0 0.0
      %1044 = vmatpush1.msra.mxu0 %v1018
      %1045 = vmatprep.subr.mxu0 0.0
      %1046 = vmatpush1.msra.mxu0 %v1017
      %1047 = vmatprep.subr.mxu0 0.0
      %1048 = vmatpush1.msra.mxu0 %v1016
      %1049 = vmatprep.subr.mxu0 0.0
      %1050 = vmatpush1.msra.mxu0 %v1015
      %1051 = vmatprep.subr.mxu0 0.0
      %1052 = vmatpush1.msra.mxu0 %v1014
      %1053 = vmatprep.subr.mxu0 0.0
      %1054 = vmatpush1.msra.mxu0 %v1013
      %1055 = vmatprep.subr.mxu0 0.0
      %1056 = vmatpush1.msra.mxu0 %v1012
      %1057 = vmatprep.subr.mxu0 0.0
      %1058 = vmatpush1.msra.mxu0 %v1011
      %1059 = vmatprep.subr.mxu0 0.0
      %1060 = vmatpush2.msra.mxu0 0.0
      %1061 = vmatprep.subr.mxu0 0.0
      %1062 = vmatpush2.msra.mxu0 0.0
      %1063 = vmatprep.subr.mxu0 0.0
      %1064 = vmatpush2.msra.mxu0 0.0
      %1065 = vmatprep.subr.mxu0 0.0
      %1066 = vmatpush2.msra.mxu0 0.0
      %1067 = vmatprep.subr.mxu0 0.0
      %1068 = vmatpush2.msra.mxu0 0.0
      %1069 = vmatprep.subr.mxu0 0.0
      %1070 = vmatpush2.msra.mxu0 0.0
      %1071 = vmatprep.subr.mxu0 0.0
      %1072 = vmatpush2.msra.mxu0 0.0
      %1073 = vmatprep.subr.mxu0 0.0
      %1074 = vmatpush2.msra.mxu0 0.0
      %1075 = vmatprep.subr.mxu0 0.0
      %1076 = vmatpush2.msra.mxu0 0.0
      %1077 = vmatprep.subr.mxu0 0.0
      %1078 = vmatpush2.msra.mxu0 0.0
      %1079 = vmatprep.subr.mxu0 0.0
      %1080 = vmatpush2.msra.mxu0 0.0
      %1081 = vmatprep.subr.mxu0 0.0
      %1082 = vmatpush2.msra.mxu0 0.0
      %1083 = vmatprep.subr.mxu0 0.0
      %1084 = vmatpush2.msra.mxu0 0.0
      %1085 = vmatprep.subr.mxu0 0.0
      %1086 = vmatpush2.msra.mxu0 0.0
      %1087 = vmatprep.subr.mxu0 0.0
      %1088 = vmatpush2.msra.mxu0 0.0
      %1089 = vmatprep.subr.mxu0 0.0
      %1090 = vmatpush2.msra.mxu0 0.0
      %1091 = vmatprep.mubr.f32.mxu0 0.0
      %1092 = vmatmul.mubr.f32.gmra.mxu0 %v1003
      %v1093 = vpop.f32.mrf.mxu0
      %v1094 = vadd.f32 0.0, %v1093
      %v1095 = vpop.f32.mrf.mxu0
      %1096 = vmatprep.mubr.f32.mxu0 0.0
      %1097 = vmatmul.mubr.f32.gmra.mxu0 %v1004
      %v1098 = vpop.f32.mrf.mxu0
      %v1099 = vadd.f32 0.0, %v1098
      %v1100 = vpop.f32.mrf.mxu0
      %1101 = vmatprep.mubr.f32.mxu0 0.0
      %1102 = vmatmul.mubr.f32.gmra.mxu0 %v1005
      %v1103 = vpop.f32.mrf.mxu0
      %v1104 = vadd.f32 0.0, %v1103
      %v1105 = vpop.f32.mrf.mxu0
      %1106 = vmatprep.mubr.f32.mxu0 0.0
      %1107 = vmatmul.mubr.f32.gmra.mxu0 %v1006
      %v1108 = vpop.f32.mrf.mxu0
      %v1109 = vadd.f32 0.0, %v1108
      %v1110 = vpop.f32.mrf.mxu0
      %1111 = vmatprep.mubr.f32.mxu0 0.0
      %1112 = vmatmul.mubr.f32.gmra.mxu0 %v1007
      %v1113 = vpop.f32.mrf.mxu0
      %v1114 = vadd.f32 0.0, %v1113
      %v1115 = vpop.f32.mrf.mxu0
      %1116 = vmatprep.mubr.f32.mxu0 0.0
      %1117 = vmatmul.mubr.f32.gmra.mxu0 %v1008
      %v1118 = vpop.f32.mrf.mxu0
      %v1119 = vadd.f32 0.0, %v1118
      %v1120 = vpop.f32.mrf.mxu0
      %1121 = vmatprep.mubr.f32.mxu0 0.0
      %1122 = vmatmul.mubr.f32.gmra.mxu0 %v1009
      %v1123 = vpop.f32.mrf.mxu0
      %v1124 = vadd.f32 0.0, %v1123
      %v1125 = vpop.f32.mrf.mxu0
      %1126 = vmatprep.mubr.f32.mxu0 0.0
      %1127 = vmatmul.mubr.f32.gmra.mxu0 %v1010
      %v1128 = vpop.f32.mrf.mxu0
      %v1129 = vadd.f32 0.0, %v1128
      %v1130 = vpop.f32.mrf.mxu0
      %1131 = vdwg.mxu0
      %v1132 = vadd.f32 %v987, %v1094
      %v1133 = vadd.f32 %v988, %v1099
      %v1134 = vadd.f32 %v989, %v1104
      %v1135 = vadd.f32 %v990, %v1109
      %v1136 = vadd.f32 %v991, %v1114
      %v1137 = vadd.f32 %v992, %v1119
      %v1138 = vadd.f32 %v993, %v1124
      %v1139 = vadd.f32 %v994, %v1129
      %v1140 = vld [vmem:[#allocation2 + $0xf] sm:$0xff]
      %v1141 = vld [vmem:[#allocation2 + $0x17] sm:$0xff]
      %v1142 = vld [vmem:[#allocation2 + $0x1f] sm:$0xff]
      %v1143 = vld [vmem:[#allocation2 + $0x27] sm:$0xff]
      %v1144 = vld [vmem:[#allocation2 + $0x2f] sm:$0xff]
      %v1145 = vld [vmem:[#allocation2 + $0x37] sm:$0xff]
      %v1146 = vld [vmem:[#allocation2 + $0x3f] sm:$0xff]
      %v1147 = vld [vmem:[#allocation2 + $0x47] sm:$0xff]
      %v1148 = vmul.f32 %v1140, %v673
      %v1149 = vmul.f32 %v1141, %v674
      %v1150 = vmul.f32 %v1142, %v675
      %v1151 = vmul.f32 %v1143, %v676
      %v1152 = vmul.f32 %v1144, %v677
      %v1153 = vmul.f32 %v1145, %v678
      %v1154 = vmul.f32 %v1146, %v679
      %v1155 = vmul.f32 %v1147, %v680
      %v1156 = vld [vmem:[%s4 + $0x180] sm:$0xff]
      %v1157 = vld [vmem:[%s4 + $0x188] sm:$0xff]
      %v1158 = vld [vmem:[%s4 + $0x190] sm:$0xff]
      %v1159 = vld [vmem:[%s4 + $0x198] sm:$0xff]
      %v1160 = vld [vmem:[%s4 + $0x1a0] sm:$0xff]
      %v1161 = vld [vmem:[%s4 + $0x1a8] sm:$0xff]
      %v1162 = vld [vmem:[%s4 + $0x1b0] sm:$0xff]
      %v1163 = vld [vmem:[%s4 + $0x1b8] sm:$0xff]
      %v1164 = vld [vmem:[%s4 + $0x1c0] sm:$0xff]
      %v1165 = vld [vmem:[%s4 + $0x1c8] sm:$0xff]
      %v1166 = vld [vmem:[%s4 + $0x1d0] sm:$0xff]
      %v1167 = vld [vmem:[%s4 + $0x1d8] sm:$0xff]
      %v1168 = vld [vmem:[%s4 + $0x1e0] sm:$0xff]
      %v1169 = vld [vmem:[%s4 + $0x1e8] sm:$0xff]
      %v1170 = vld [vmem:[%s4 + $0x1f0] sm:$0xff]
      %v1171 = vld [vmem:[%s4 + $0x1f8] sm:$0xff]
      %1172 = vmatprep.subr.mxu0 0.0
      %1173 = vmatpush1.msra.mxu0 %v1171
      %1174 = vmatprep.subr.mxu0 0.0
      %1175 = vmatpush1.msra.mxu0 %v1170
      %1176 = vmatprep.subr.mxu0 0.0
      %1177 = vmatpush1.msra.mxu0 %v1169
      %1178 = vmatprep.subr.mxu0 0.0
      %1179 = vmatpush1.msra.mxu0 %v1168
      %1180 = vmatprep.subr.mxu0 0.0
      %1181 = vmatpush1.msra.mxu0 %v1167
      %1182 = vmatprep.subr.mxu0 0.0
      %1183 = vmatpush1.msra.mxu0 %v1166
      %1184 = vmatprep.subr.mxu0 0.0
      %1185 = vmatpush1.msra.mxu0 %v1165
      %1186 = vmatprep.subr.mxu0 0.0
      %1187 = vmatpush1.msra.mxu0 %v1164
      %1188 = vmatprep.subr.mxu0 0.0
      %1189 = vmatpush1.msra.mxu0 %v1163
      %1190 = vmatprep.subr.mxu0 0.0
      %1191 = vmatpush1.msra.mxu0 %v1162
      %1192 = vmatprep.subr.mxu0 0.0
      %1193 = vmatpush1.msra.mxu0 %v1161
      %1194 = vmatprep.subr.mxu0 0.0
      %1195 = vmatpush1.msra.mxu0 %v1160
      %1196 = vmatprep.subr.mxu0 0.0
      %1197 = vmatpush1.msra.mxu0 %v1159
      %1198 = vmatprep.subr.mxu0 0.0
      %1199 = vmatpush1.msra.mxu0 %v1158
      %1200 = vmatprep.subr.mxu0 0.0
      %1201 = vmatpush1.msra.mxu0 %v1157
      %1202 = vmatprep.subr.mxu0 0.0
      %1203 = vmatpush1.msra.mxu0 %v1156
      %1204 = vmatprep.subr.mxu0 0.0
      %1205 = vmatpush2.msra.mxu0 0.0
      %1206 = vmatprep.subr.mxu0 0.0
      %1207 = vmatpush2.msra.mxu0 0.0
      %1208 = vmatprep.subr.mxu0 0.0
      %1209 = vmatpush2.msra.mxu0 0.0
      %1210 = vmatprep.subr.mxu0 0.0
      %1211 = vmatpush2.msra.mxu0 0.0
      %1212 = vmatprep.subr.mxu0 0.0
      %1213 = vmatpush2.msra.mxu0 0.0
      %1214 = vmatprep.subr.mxu0 0.0
      %1215 = vmatpush2.msra.mxu0 0.0
      %1216 = vmatprep.subr.mxu0 0.0
      %1217 = vmatpush2.msra.mxu0 0.0
      %1218 = vmatprep.subr.mxu0 0.0
      %1219 = vmatpush2.msra.mxu0 0.0
      %1220 = vmatprep.subr.mxu0 0.0
      %1221 = vmatpush2.msra.mxu0 0.0
      %1222 = vmatprep.subr.mxu0 0.0
      %1223 = vmatpush2.msra.mxu0 0.0
      %1224 = vmatprep.subr.mxu0 0.0
      %1225 = vmatpush2.msra.mxu0 0.0
      %1226 = vmatprep.subr.mxu0 0.0
      %1227 = vmatpush2.msra.mxu0 0.0
      %1228 = vmatprep.subr.mxu0 0.0
      %1229 = vmatpush2.msra.mxu0 0.0
      %1230 = vmatprep.subr.mxu0 0.0
      %1231 = vmatpush2.msra.mxu0 0.0
      %1232 = vmatprep.subr.mxu0 0.0
      %1233 = vmatpush2.msra.mxu0 0.0
      %1234 = vmatprep.subr.mxu0 0.0
      %1235 = vmatpush2.msra.mxu0 0.0
      %1236 = vmatprep.mubr.f32.mxu0 0.0
      %1237 = vmatmul.mubr.f32.gmra.mxu0 %v1148
      %v1238 = vpop.f32.mrf.mxu0
      %v1239 = vadd.f32 0.0, %v1238
      %v1240 = vpop.f32.mrf.mxu0
      %1241 = vmatprep.mubr.f32.mxu0 0.0
      %1242 = vmatmul.mubr.f32.gmra.mxu0 %v1149
      %v1243 = vpop.f32.mrf.mxu0
      %v1244 = vadd.f32 0.0, %v1243
      %v1245 = vpop.f32.mrf.mxu0
      %1246 = vmatprep.mubr.f32.mxu0 0.0
      %1247 = vmatmul.mubr.f32.gmra.mxu0 %v1150
      %v1248 = vpop.f32.mrf.mxu0
      %v1249 = vadd.f32 0.0, %v1248
      %v1250 = vpop.f32.mrf.mxu0
      %1251 = vmatprep.mubr.f32.mxu0 0.0
      %1252 = vmatmul.mubr.f32.gmra.mxu0 %v1151
      %v1253 = vpop.f32.mrf.mxu0
      %v1254 = vadd.f32 0.0, %v1253
      %v1255 = vpop.f32.mrf.mxu0
      %1256 = vmatprep.mubr.f32.mxu0 0.0
      %1257 = vmatmul.mubr.f32.gmra.mxu0 %v1152
      %v1258 = vpop.f32.mrf.mxu0
      %v1259 = vadd.f32 0.0, %v1258
      %v1260 = vpop.f32.mrf.mxu0
      %1261 = vmatprep.mubr.f32.mxu0 0.0
      %1262 = vmatmul.mubr.f32.gmra.mxu0 %v1153
      %v1263 = vpop.f32.mrf.mxu0
      %v1264 = vadd.f32 0.0, %v1263
      %v1265 = vpop.f32.mrf.mxu0
      %1266 = vmatprep.mubr.f32.mxu0 0.0
      %1267 = vmatmul.mubr.f32.gmra.mxu0 %v1154
      %v1268 = vpop.f32.mrf.mxu0
      %v1269 = vadd.f32 0.0, %v1268
      %v1270 = vpop.f32.mrf.mxu0
      %1271 = vmatprep.mubr.f32.mxu0 0.0
      %1272 = vmatmul.mubr.f32.gmra.mxu0 %v1155
      %v1273 = vpop.f32.mrf.mxu0
      %v1274 = vadd.f32 0.0, %v1273
      %v1275 = vpop.f32.mrf.mxu0
      %1276 = vdwg.mxu0
      %v1277 = vadd.f32 %v1132, %v1239
      %v1278 = vadd.f32 %v1133, %v1244
      %v1279 = vadd.f32 %v1134, %v1249
      %v1280 = vadd.f32 %v1135, %v1254
      %v1281 = vadd.f32 %v1136, %v1259
      %v1282 = vadd.f32 %v1137, %v1264
      %v1283 = vadd.f32 %v1138, %v1269
      %v1284 = vadd.f32 %v1139, %v1274
      %v1285 = vld [vmem:[#allocation2 + $0x10] sm:$0xff]
      %v1286 = vld [vmem:[#allocation2 + $0x18] sm:$0xff]
      %v1287 = vld [vmem:[#allocation2 + $0x20] sm:$0xff]
      %v1288 = vld [vmem:[#allocation2 + $0x28] sm:$0xff]
      %v1289 = vld [vmem:[#allocation2 + $0x30] sm:$0xff]
      %v1290 = vld [vmem:[#allocation2 + $0x38] sm:$0xff]
      %v1291 = vld [vmem:[#allocation2 + $0x40] sm:$0xff]
      %v1292 = vld [vmem:[#allocation2 + $0x48] sm:$0xff]
      %v1293 = vld [vmem:[%s4 + $0x200] sm:$0xff]
      %v1294 = vld [vmem:[%s4 + $0x208] sm:$0xff]
      %v1295 = vld [vmem:[%s4 + $0x210] sm:$0xff]
      %v1296 = vld [vmem:[%s4 + $0x218] sm:$0xff]
      %v1297 = vld [vmem:[%s4 + $0x220] sm:$0xff]
      %v1298 = vld [vmem:[%s4 + $0x228] sm:$0xff]
      %v1299 = vld [vmem:[%s4 + $0x230] sm:$0xff]
      %v1300 = vld [vmem:[%s4 + $0x238] sm:$0xff]
      %v1301 = vld [vmem:[%s4 + $0x240] sm:$0xff]
      %v1302 = vld [vmem:[%s4 + $0x248] sm:$0xff]
      %v1303 = vld [vmem:[%s4 + $0x250] sm:$0xff]
      %v1304 = vld [vmem:[%s4 + $0x258] sm:$0xff]
      %v1305 = vld [vmem:[%s4 + $0x260] sm:$0xff]
      %v1306 = vld [vmem:[%s4 + $0x268] sm:$0xff]
      %v1307 = vld [vmem:[%s4 + $0x270] sm:$0xff]
      %v1308 = vld [vmem:[%s4 + $0x278] sm:$0xff]
      %1309 = vmatprep.subr.mxu0 0.0
      %1310 = vmatpush1.msra.mxu0 %v1308
      %1311 = vmatprep.subr.mxu0 0.0
      %1312 = vmatpush1.msra.mxu0 %v1307
      %1313 = vmatprep.subr.mxu0 0.0
      %1314 = vmatpush1.msra.mxu0 %v1306
      %1315 = vmatprep.subr.mxu0 0.0
      %1316 = vmatpush1.msra.mxu0 %v1305
      %1317 = vmatprep.subr.mxu0 0.0
      %1318 = vmatpush1.msra.mxu0 %v1304
      %1319 = vmatprep.subr.mxu0 0.0
      %1320 = vmatpush1.msra.mxu0 %v1303
      %1321 = vmatprep.subr.mxu0 0.0
      %1322 = vmatpush1.msra.mxu0 %v1302
      %1323 = vmatprep.subr.mxu0 0.0
      %1324 = vmatpush1.msra.mxu0 %v1301
      %1325 = vmatprep.subr.mxu0 0.0
      %1326 = vmatpush1.msra.mxu0 %v1300
      %1327 = vmatprep.subr.mxu0 0.0
      %1328 = vmatpush1.msra.mxu0 %v1299
      %1329 = vmatprep.subr.mxu0 0.0
      %1330 = vmatpush1.msra.mxu0 %v1298
      %1331 = vmatprep.subr.mxu0 0.0
      %1332 = vmatpush1.msra.mxu0 %v1297
      %1333 = vmatprep.subr.mxu0 0.0
      %1334 = vmatpush1.msra.mxu0 %v1296
      %1335 = vmatprep.subr.mxu0 0.0
      %1336 = vmatpush1.msra.mxu0 %v1295
      %1337 = vmatprep.subr.mxu0 0.0
      %1338 = vmatpush1.msra.mxu0 %v1294
      %1339 = vmatprep.subr.mxu0 0.0
      %1340 = vmatpush1.msra.mxu0 %v1293
      %1341 = vmatprep.subr.mxu0 0.0
      %1342 = vmatpush2.msra.mxu0 0.0
      %1343 = vmatprep.subr.mxu0 0.0
      %1344 = vmatpush2.msra.mxu0 0.0
      %1345 = vmatprep.subr.mxu0 0.0
      %1346 = vmatpush2.msra.mxu0 0.0
      %1347 = vmatprep.subr.mxu0 0.0
      %1348 = vmatpush2.msra.mxu0 0.0
      %1349 = vmatprep.subr.mxu0 0.0
      %1350 = vmatpush2.msra.mxu0 0.0
      %1351 = vmatprep.subr.mxu0 0.0
      %1352 = vmatpush2.msra.mxu0 0.0
      %1353 = vmatprep.subr.mxu0 0.0
      %1354 = vmatpush2.msra.mxu0 0.0
      %1355 = vmatprep.subr.mxu0 0.0
      %1356 = vmatpush2.msra.mxu0 0.0
      %1357 = vmatprep.subr.mxu0 0.0
      %1358 = vmatpush2.msra.mxu0 0.0
      %1359 = vmatprep.subr.mxu0 0.0
      %1360 = vmatpush2.msra.mxu0 0.0
      %1361 = vmatprep.subr.mxu0 0.0
      %1362 = vmatpush2.msra.mxu0 0.0
      %1363 = vmatprep.subr.mxu0 0.0
      %1364 = vmatpush2.msra.mxu0 0.0
      %1365 = vmatprep.subr.mxu0 0.0
      %1366 = vmatpush2.msra.mxu0 0.0
      %1367 = vmatprep.subr.mxu0 0.0
      %1368 = vmatpush2.msra.mxu0 0.0
      %1369 = vmatprep.subr.mxu0 0.0
      %1370 = vmatpush2.msra.mxu0 0.0
      %1371 = vmatprep.subr.mxu0 0.0
      %1372 = vmatpush2.msra.mxu0 0.0
      %1373 = vmatprep.mubr.f32.mxu0 0.0
      %1374 = vmatmul.mubr.f32.gmra.mxu0 %v1285
      %v1375 = vpop.f32.mrf.mxu0
      %v1376 = vadd.f32 0.0, %v1375
      %v1377 = vpop.f32.mrf.mxu0
      %1378 = vmatprep.mubr.f32.mxu0 0.0
      %1379 = vmatmul.mubr.f32.gmra.mxu0 %v1286
      %v1380 = vpop.f32.mrf.mxu0
      %v1381 = vadd.f32 0.0, %v1380
      %v1382 = vpop.f32.mrf.mxu0
      %1383 = vmatprep.mubr.f32.mxu0 0.0
      %1384 = vmatmul.mubr.f32.gmra.mxu0 %v1287
      %v1385 = vpop.f32.mrf.mxu0
      %v1386 = vadd.f32 0.0, %v1385
      %v1387 = vpop.f32.mrf.mxu0
      %1388 = vmatprep.mubr.f32.mxu0 0.0
      %1389 = vmatmul.mubr.f32.gmra.mxu0 %v1288
      %v1390 = vpop.f32.mrf.mxu0
      %v1391 = vadd.f32 0.0, %v1390
      %v1392 = vpop.f32.mrf.mxu0
      %1393 = vmatprep.mubr.f32.mxu0 0.0
      %1394 = vmatmul.mubr.f32.gmra.mxu0 %v1289
      %v1395 = vpop.f32.mrf.mxu0
      %v1396 = vadd.f32 0.0, %v1395
      %v1397 = vpop.f32.mrf.mxu0
      %1398 = vmatprep.mubr.f32.mxu0 0.0
      %1399 = vmatmul.mubr.f32.gmra.mxu0 %v1290
      %v1400 = vpop.f32.mrf.mxu0
      %v1401 = vadd.f32 0.0, %v1400
      %v1402 = vpop.f32.mrf.mxu0
      %1403 = vmatprep.mubr.f32.mxu0 0.0
      %1404 = vmatmul.mubr.f32.gmra.mxu0 %v1291
      %v1405 = vpop.f32.mrf.mxu0
      %v1406 = vadd.f32 0.0, %v1405
      %v1407 = vpop.f32.mrf.mxu0
      %1408 = vmatprep.mubr.f32.mxu0 0.0
      %1409 = vmatmul.mubr.f32.gmra.mxu0 %v1292
      %v1410 = vpop.f32.mrf.mxu0
      %v1411 = vadd.f32 0.0, %v1410
      %v1412 = vpop.f32.mrf.mxu0
      %1413 = vdwg.mxu0
      %v1414 = vadd.f32 %v1277, %v1376
      %v1415 = vadd.f32 %v1278, %v1381
      %v1416 = vadd.f32 %v1279, %v1386
      %v1417 = vadd.f32 %v1280, %v1391
      %v1418 = vadd.f32 %v1281, %v1396
      %v1419 = vadd.f32 %v1282, %v1401
      %v1420 = vadd.f32 %v1283, %v1406
      %v1421 = vadd.f32 %v1284, %v1411
      %v1422 = vld [vmem:[#allocation2 + $0x11] sm:$0xff]
      %v1423 = vld [vmem:[#allocation2 + $0x19] sm:$0xff]
      %v1424 = vld [vmem:[#allocation2 + $0x21] sm:$0xff]
      %v1425 = vld [vmem:[#allocation2 + $0x29] sm:$0xff]
      %v1426 = vld [vmem:[#allocation2 + $0x31] sm:$0xff]
      %v1427 = vld [vmem:[#allocation2 + $0x39] sm:$0xff]
      %v1428 = vld [vmem:[#allocation2 + $0x41] sm:$0xff]
      %v1429 = vld [vmem:[#allocation2 + $0x49] sm:$0xff]
      %v1430 = vmul.f32 %v1422, %v697
      %v1431 = vmul.f32 %v1423, %v698
      %v1432 = vmul.f32 %v1424, %v699
      %v1433 = vmul.f32 %v1425, %v700
      %v1434 = vmul.f32 %v1426, %v701
      %v1435 = vmul.f32 %v1427, %v702
      %v1436 = vmul.f32 %v1428, %v703
      %v1437 = vmul.f32 %v1429, %v704
      %v1438 = vld [vmem:[%s4 + $0x280] sm:$0xff]
      %v1439 = vld [vmem:[%s4 + $0x288] sm:$0xff]
      %v1440 = vld [vmem:[%s4 + $0x290] sm:$0xff]
      %v1441 = vld [vmem:[%s4 + $0x298] sm:$0xff]
      %v1442 = vld [vmem:[%s4 + $0x2a0] sm:$0xff]
      %v1443 = vld [vmem:[%s4 + $0x2a8] sm:$0xff]
      %v1444 = vld [vmem:[%s4 + $0x2b0] sm:$0xff]
      %v1445 = vld [vmem:[%s4 + $0x2b8] sm:$0xff]
      %v1446 = vld [vmem:[%s4 + $0x2c0] sm:$0xff]
      %v1447 = vld [vmem:[%s4 + $0x2c8] sm:$0xff]
      %v1448 = vld [vmem:[%s4 + $0x2d0] sm:$0xff]
      %v1449 = vld [vmem:[%s4 + $0x2d8] sm:$0xff]
      %v1450 = vld [vmem:[%s4 + $0x2e0] sm:$0xff]
      %v1451 = vld [vmem:[%s4 + $0x2e8] sm:$0xff]
      %v1452 = vld [vmem:[%s4 + $0x2f0] sm:$0xff]
      %v1453 = vld [vmem:[%s4 + $0x2f8] sm:$0xff]
      %1454 = vmatprep.subr.mxu0 0.0
      %1455 = vmatpush1.msra.mxu0 %v1453
      %1456 = vmatprep.subr.mxu0 0.0
      %1457 = vmatpush1.msra.mxu0 %v1452
      %1458 = vmatprep.subr.mxu0 0.0
      %1459 = vmatpush1.msra.mxu0 %v1451
      %1460 = vmatprep.subr.mxu0 0.0
      %1461 = vmatpush1.msra.mxu0 %v1450
      %1462 = vmatprep.subr.mxu0 0.0
      %1463 = vmatpush1.msra.mxu0 %v1449
      %1464 = vmatprep.subr.mxu0 0.0
      %1465 = vmatpush1.msra.mxu0 %v1448
      %1466 = vmatprep.subr.mxu0 0.0
      %1467 = vmatpush1.msra.mxu0 %v1447
      %1468 = vmatprep.subr.mxu0 0.0
      %1469 = vmatpush1.msra.mxu0 %v1446
      %1470 = vmatprep.subr.mxu0 0.0
      %1471 = vmatpush1.msra.mxu0 %v1445
      %1472 = vmatprep.subr.mxu0 0.0
      %1473 = vmatpush1.msra.mxu0 %v1444
      %1474 = vmatprep.subr.mxu0 0.0
      %1475 = vmatpush1.msra.mxu0 %v1443
      %1476 = vmatprep.subr.mxu0 0.0
      %1477 = vmatpush1.msra.mxu0 %v1442
      %1478 = vmatprep.subr.mxu0 0.0
      %1479 = vmatpush1.msra.mxu0 %v1441
      %1480 = vmatprep.subr.mxu0 0.0
      %1481 = vmatpush1.msra.mxu0 %v1440
      %1482 = vmatprep.subr.mxu0 0.0
      %1483 = vmatpush1.msra.mxu0 %v1439
      %1484 = vmatprep.subr.mxu0 0.0
      %1485 = vmatpush1.msra.mxu0 %v1438
      %1486 = vmatprep.subr.mxu0 0.0
      %1487 = vmatpush2.msra.mxu0 0.0
      %1488 = vmatprep.subr.mxu0 0.0
      %1489 = vmatpush2.msra.mxu0 0.0
      %1490 = vmatprep.subr.mxu0 0.0
      %1491 = vmatpush2.msra.mxu0 0.0
      %1492 = vmatprep.subr.mxu0 0.0
      %1493 = vmatpush2.msra.mxu0 0.0
      %1494 = vmatprep.subr.mxu0 0.0
      %1495 = vmatpush2.msra.mxu0 0.0
      %1496 = vmatprep.subr.mxu0 0.0
      %1497 = vmatpush2.msra.mxu0 0.0
      %1498 = vmatprep.subr.mxu0 0.0
      %1499 = vmatpush2.msra.mxu0 0.0
      %1500 = vmatprep.subr.mxu0 0.0
      %1501 = vmatpush2.msra.mxu0 0.0
      %1502 = vmatprep.subr.mxu0 0.0
      %1503 = vmatpush2.msra.mxu0 0.0
      %1504 = vmatprep.subr.mxu0 0.0
      %1505 = vmatpush2.msra.mxu0 0.0
      %1506 = vmatprep.subr.mxu0 0.0
      %1507 = vmatpush2.msra.mxu0 0.0
      %1508 = vmatprep.subr.mxu0 0.0
      %1509 = vmatpush2.msra.mxu0 0.0
      %1510 = vmatprep.subr.mxu0 0.0
      %1511 = vmatpush2.msra.mxu0 0.0
      %1512 = vmatprep.subr.mxu0 0.0
      %1513 = vmatpush2.msra.mxu0 0.0
      %1514 = vmatprep.subr.mxu0 0.0
      %1515 = vmatpush2.msra.mxu0 0.0
      %1516 = vmatprep.subr.mxu0 0.0
      %1517 = vmatpush2.msra.mxu0 0.0
      %1518 = vmatprep.mubr.f32.mxu0 0.0
      %1519 = vmatmul.mubr.f32.gmra.mxu0 %v1430
      %v1520 = vpop.f32.mrf.mxu0
      %v1521 = vadd.f32 0.0, %v1520
      %v1522 = vpop.f32.mrf.mxu0
      %1523 = vmatprep.mubr.f32.mxu0 0.0
      %1524 = vmatmul.mubr.f32.gmra.mxu0 %v1431
      %v1525 = vpop.f32.mrf.mxu0
      %v1526 = vadd.f32 0.0, %v1525
      %v1527 = vpop.f32.mrf.mxu0
      %1528 = vmatprep.mubr.f32.mxu0 0.0
      %1529 = vmatmul.mubr.f32.gmra.mxu0 %v1432
      %v1530 = vpop.f32.mrf.mxu0
      %v1531 = vadd.f32 0.0, %v1530
      %v1532 = vpop.f32.mrf.mxu0
      %1533 = vmatprep.mubr.f32.mxu0 0.0
      %1534 = vmatmul.mubr.f32.gmra.mxu0 %v1433
      %v1535 = vpop.f32.mrf.mxu0
      %v1536 = vadd.f32 0.0, %v1535
      %v1537 = vpop.f32.mrf.mxu0
      %1538 = vmatprep.mubr.f32.mxu0 0.0
      %1539 = vmatmul.mubr.f32.gmra.mxu0 %v1434
      %v1540 = vpop.f32.mrf.mxu0
      %v1541 = vadd.f32 0.0, %v1540
      %v1542 = vpop.f32.mrf.mxu0
      %1543 = vmatprep.mubr.f32.mxu0 0.0
      %1544 = vmatmul.mubr.f32.gmra.mxu0 %v1435
      %v1545 = vpop.f32.mrf.mxu0
      %v1546 = vadd.f32 0.0, %v1545
      %v1547 = vpop.f32.mrf.mxu0
      %1548 = vmatprep.mubr.f32.mxu0 0.0
      %1549 = vmatmul.mubr.f32.gmra.mxu0 %v1436
      %v1550 = vpop.f32.mrf.mxu0
      %v1551 = vadd.f32 0.0, %v1550
      %v1552 = vpop.f32.mrf.mxu0
      %1553 = vmatprep.mubr.f32.mxu0 0.0
      %1554 = vmatmul.mubr.f32.gmra.mxu0 %v1437
      %v1555 = vpop.f32.mrf.mxu0
      %v1556 = vadd.f32 0.0, %v1555
      %v1557 = vpop.f32.mrf.mxu0
      %1558 = vdwg.mxu0
      %v1559 = vadd.f32 %v1414, %v1521
      %v1560 = vadd.f32 %v1415, %v1526
      %v1561 = vadd.f32 %v1416, %v1531
      %v1562 = vadd.f32 %v1417, %v1536
      %v1563 = vadd.f32 %v1418, %v1541
      %v1564 = vadd.f32 %v1419, %v1546
      %v1565 = vadd.f32 %v1420, %v1551
      %v1566 = vadd.f32 %v1421, %v1556
      %v1567 = vld [vmem:[#allocation2 + $0x17] sm:$0xff]
      %v1568 = vld [vmem:[#allocation2 + $0x1f] sm:$0xff]
      %v1569 = vld [vmem:[#allocation2 + $0x27] sm:$0xff]
      %v1570 = vld [vmem:[#allocation2 + $0x2f] sm:$0xff]
      %v1571 = vld [vmem:[#allocation2 + $0x37] sm:$0xff]
      %v1572 = vld [vmem:[#allocation2 + $0x3f] sm:$0xff]
      %v1573 = vld [vmem:[#allocation2 + $0x47] sm:$0xff]
      %v1574 = vld [vmem:[#allocation2 + $0x4f] sm:$0xff]
      %v1575 = vmul.f32 %v1567, %v673
      %v1576 = vmul.f32 %v1568, %v674
      %v1577 = vmul.f32 %v1569, %v675
      %v1578 = vmul.f32 %v1570, %v676
      %v1579 = vmul.f32 %v1571, %v677
      %v1580 = vmul.f32 %v1572, %v678
      %v1581 = vmul.f32 %v1573, %v679
      %v1582 = vmul.f32 %v1574, %v680
      %v1583 = vld [vmem:[%s4 + $0x300] sm:$0xff]
      %v1584 = vld [vmem:[%s4 + $0x308] sm:$0xff]
      %v1585 = vld [vmem:[%s4 + $0x310] sm:$0xff]
      %v1586 = vld [vmem:[%s4 + $0x318] sm:$0xff]
      %v1587 = vld [vmem:[%s4 + $0x320] sm:$0xff]
      %v1588 = vld [vmem:[%s4 + $0x328] sm:$0xff]
      %v1589 = vld [vmem:[%s4 + $0x330] sm:$0xff]
      %v1590 = vld [vmem:[%s4 + $0x338] sm:$0xff]
      %v1591 = vld [vmem:[%s4 + $0x340] sm:$0xff]
      %v1592 = vld [vmem:[%s4 + $0x348] sm:$0xff]
      %v1593 = vld [vmem:[%s4 + $0x350] sm:$0xff]
      %v1594 = vld [vmem:[%s4 + $0x358] sm:$0xff]
      %v1595 = vld [vmem:[%s4 + $0x360] sm:$0xff]
      %v1596 = vld [vmem:[%s4 + $0x368] sm:$0xff]
      %v1597 = vld [vmem:[%s4 + $0x370] sm:$0xff]
      %v1598 = vld [vmem:[%s4 + $0x378] sm:$0xff]
      %1599 = vmatprep.subr.mxu0 0.0
      %1600 = vmatpush1.msra.mxu0 %v1598
      %1601 = vmatprep.subr.mxu0 0.0
      %1602 = vmatpush1.msra.mxu0 %v1597
      %1603 = vmatprep.subr.mxu0 0.0
      %1604 = vmatpush1.msra.mxu0 %v1596
      %1605 = vmatprep.subr.mxu0 0.0
      %1606 = vmatpush1.msra.mxu0 %v1595
      %1607 = vmatprep.subr.mxu0 0.0
      %1608 = vmatpush1.msra.mxu0 %v1594
      %1609 = vmatprep.subr.mxu0 0.0
      %1610 = vmatpush1.msra.mxu0 %v1593
      %1611 = vmatprep.subr.mxu0 0.0
      %1612 = vmatpush1.msra.mxu0 %v1592
      %1613 = vmatprep.subr.mxu0 0.0
      %1614 = vmatpush1.msra.mxu0 %v1591
      %1615 = vmatprep.subr.mxu0 0.0
      %1616 = vmatpush1.msra.mxu0 %v1590
      %1617 = vmatprep.subr.mxu0 0.0
      %1618 = vmatpush1.msra.mxu0 %v1589
      %1619 = vmatprep.subr.mxu0 0.0
      %1620 = vmatpush1.msra.mxu0 %v1588
      %1621 = vmatprep.subr.mxu0 0.0
      %1622 = vmatpush1.msra.mxu0 %v1587
      %1623 = vmatprep.subr.mxu0 0.0
      %1624 = vmatpush1.msra.mxu0 %v1586
      %1625 = vmatprep.subr.mxu0 0.0
      %1626 = vmatpush1.msra.mxu0 %v1585
      %1627 = vmatprep.subr.mxu0 0.0
      %1628 = vmatpush1.msra.mxu0 %v1584
      %1629 = vmatprep.subr.mxu0 0.0
      %1630 = vmatpush1.msra.mxu0 %v1583
      %1631 = vmatprep.subr.mxu0 0.0
      %1632 = vmatpush2.msra.mxu0 0.0
      %1633 = vmatprep.subr.mxu0 0.0
      %1634 = vmatpush2.msra.mxu0 0.0
      %1635 = vmatprep.subr.mxu0 0.0
      %1636 = vmatpush2.msra.mxu0 0.0
      %1637 = vmatprep.subr.mxu0 0.0
      %1638 = vmatpush2.msra.mxu0 0.0
      %1639 = vmatprep.subr.mxu0 0.0
      %1640 = vmatpush2.msra.mxu0 0.0
      %1641 = vmatprep.subr.mxu0 0.0
      %1642 = vmatpush2.msra.mxu0 0.0
      %1643 = vmatprep.subr.mxu0 0.0
      %1644 = vmatpush2.msra.mxu0 0.0
      %1645 = vmatprep.subr.mxu0 0.0
      %1646 = vmatpush2.msra.mxu0 0.0
      %1647 = vmatprep.subr.mxu0 0.0
      %1648 = vmatpush2.msra.mxu0 0.0
      %1649 = vmatprep.subr.mxu0 0.0
      %1650 = vmatpush2.msra.mxu0 0.0
      %1651 = vmatprep.subr.mxu0 0.0
      %1652 = vmatpush2.msra.mxu0 0.0
      %1653 = vmatprep.subr.mxu0 0.0
      %1654 = vmatpush2.msra.mxu0 0.0
      %1655 = vmatprep.subr.mxu0 0.0
      %1656 = vmatpush2.msra.mxu0 0.0
      %1657 = vmatprep.subr.mxu0 0.0
      %1658 = vmatpush2.msra.mxu0 0.0
      %1659 = vmatprep.subr.mxu0 0.0
      %1660 = vmatpush2.msra.mxu0 0.0
      %1661 = vmatprep.subr.mxu0 0.0
      %1662 = vmatpush2.msra.mxu0 0.0
      %1663 = vmatprep.mubr.f32.mxu0 0.0
      %1664 = vmatmul.mubr.f32.gmra.mxu0 %v1575
      %v1665 = vpop.f32.mrf.mxu0
      %v1666 = vadd.f32 0.0, %v1665
      %v1667 = vpop.f32.mrf.mxu0
      %1668 = vmatprep.mubr.f32.mxu0 0.0
      %1669 = vmatmul.mubr.f32.gmra.mxu0 %v1576
      %v1670 = vpop.f32.mrf.mxu0
      %v1671 = vadd.f32 0.0, %v1670
      %v1672 = vpop.f32.mrf.mxu0
      %1673 = vmatprep.mubr.f32.mxu0 0.0
      %1674 = vmatmul.mubr.f32.gmra.mxu0 %v1577
      %v1675 = vpop.f32.mrf.mxu0
      %v1676 = vadd.f32 0.0, %v1675
      %v1677 = vpop.f32.mrf.mxu0
      %1678 = vmatprep.mubr.f32.mxu0 0.0
      %1679 = vmatmul.mubr.f32.gmra.mxu0 %v1578
      %v1680 = vpop.f32.mrf.mxu0
      %v1681 = vadd.f32 0.0, %v1680
      %v1682 = vpop.f32.mrf.mxu0
      %1683 = vmatprep.mubr.f32.mxu0 0.0
      %1684 = vmatmul.mubr.f32.gmra.mxu0 %v1579
      %v1685 = vpop.f32.mrf.mxu0
      %v1686 = vadd.f32 0.0, %v1685
      %v1687 = vpop.f32.mrf.mxu0
      %1688 = vmatprep.mubr.f32.mxu0 0.0
      %1689 = vmatmul.mubr.f32.gmra.mxu0 %v1580
      %v1690 = vpop.f32.mrf.mxu0
      %v1691 = vadd.f32 0.0, %v1690
      %v1692 = vpop.f32.mrf.mxu0
      %1693 = vmatprep.mubr.f32.mxu0 0.0
      %1694 = vmatmul.mubr.f32.gmra.mxu0 %v1581
      %v1695 = vpop.f32.mrf.mxu0
      %v1696 = vadd.f32 0.0, %v1695
      %v1697 = vpop.f32.mrf.mxu0
      %1698 = vmatprep.mubr.f32.mxu0 0.0
      %1699 = vmatmul.mubr.f32.gmra.mxu0 %v1582
      %v1700 = vpop.f32.mrf.mxu0
      %v1701 = vadd.f32 0.0, %v1700
      %v1702 = vpop.f32.mrf.mxu0
      %1703 = vdwg.mxu0
      %v1704 = vadd.f32 %v1559, %v1666
      %v1705 = vadd.f32 %v1560, %v1671
      %v1706 = vadd.f32 %v1561, %v1676
      %v1707 = vadd.f32 %v1562, %v1681
      %v1708 = vadd.f32 %v1563, %v1686
      %v1709 = vadd.f32 %v1564, %v1691
      %v1710 = vadd.f32 %v1565, %v1696
      %v1711 = vadd.f32 %v1566, %v1701
      %v1712 = vld [vmem:[#allocation2 + $0x18] sm:$0xff]
      %v1713 = vld [vmem:[#allocation2 + $0x20] sm:$0xff]
      %v1714 = vld [vmem:[#allocation2 + $0x28] sm:$0xff]
      %v1715 = vld [vmem:[#allocation2 + $0x30] sm:$0xff]
      %v1716 = vld [vmem:[#allocation2 + $0x38] sm:$0xff]
      %v1717 = vld [vmem:[#allocation2 + $0x40] sm:$0xff]
      %v1718 = vld [vmem:[#allocation2 + $0x48] sm:$0xff]
      %v1719 = vld [vmem:[#allocation2 + $0x50] sm:$0xff]
      %v1720 = vld [vmem:[%s4 + $0x380] sm:$0xff]
      %v1721 = vld [vmem:[%s4 + $0x388] sm:$0xff]
      %v1722 = vld [vmem:[%s4 + $0x390] sm:$0xff]
      %v1723 = vld [vmem:[%s4 + $0x398] sm:$0xff]
      %v1724 = vld [vmem:[%s4 + $0x3a0] sm:$0xff]
      %v1725 = vld [vmem:[%s4 + $0x3a8] sm:$0xff]
      %v1726 = vld [vmem:[%s4 + $0x3b0] sm:$0xff]
      %v1727 = vld [vmem:[%s4 + $0x3b8] sm:$0xff]
      %v1728 = vld [vmem:[%s4 + $0x3c0] sm:$0xff]
      %v1729 = vld [vmem:[%s4 + $0x3c8] sm:$0xff]
      %v1730 = vld [vmem:[%s4 + $0x3d0] sm:$0xff]
      %v1731 = vld [vmem:[%s4 + $0x3d8] sm:$0xff]
      %v1732 = vld [vmem:[%s4 + $0x3e0] sm:$0xff]
      %v1733 = vld [vmem:[%s4 + $0x3e8] sm:$0xff]
      %v1734 = vld [vmem:[%s4 + $0x3f0] sm:$0xff]
      %v1735 = vld [vmem:[%s4 + $0x3f8] sm:$0xff]
      %1736 = vmatprep.subr.mxu0 0.0
      %1737 = vmatpush1.msra.mxu0 %v1735
      %1738 = vmatprep.subr.mxu0 0.0
      %1739 = vmatpush1.msra.mxu0 %v1734
      %1740 = vmatprep.subr.mxu0 0.0
      %1741 = vmatpush1.msra.mxu0 %v1733
      %1742 = vmatprep.subr.mxu0 0.0
      %1743 = vmatpush1.msra.mxu0 %v1732
      %1744 = vmatprep.subr.mxu0 0.0
      %1745 = vmatpush1.msra.mxu0 %v1731
      %1746 = vmatprep.subr.mxu0 0.0
      %1747 = vmatpush1.msra.mxu0 %v1730
      %1748 = vmatprep.subr.mxu0 0.0
      %1749 = vmatpush1.msra.mxu0 %v1729
      %1750 = vmatprep.subr.mxu0 0.0
      %1751 = vmatpush1.msra.mxu0 %v1728
      %1752 = vmatprep.subr.mxu0 0.0
      %1753 = vmatpush1.msra.mxu0 %v1727
      %1754 = vmatprep.subr.mxu0 0.0
      %1755 = vmatpush1.msra.mxu0 %v1726
      %1756 = vmatprep.subr.mxu0 0.0
      %1757 = vmatpush1.msra.mxu0 %v1725
      %1758 = vmatprep.subr.mxu0 0.0
      %1759 = vmatpush1.msra.mxu0 %v1724
      %1760 = vmatprep.subr.mxu0 0.0
      %1761 = vmatpush1.msra.mxu0 %v1723
      %1762 = vmatprep.subr.mxu0 0.0
      %1763 = vmatpush1.msra.mxu0 %v1722
      %1764 = vmatprep.subr.mxu0 0.0
      %1765 = vmatpush1.msra.mxu0 %v1721
      %1766 = vmatprep.subr.mxu0 0.0
      %1767 = vmatpush1.msra.mxu0 %v1720
      %1768 = vmatprep.subr.mxu0 0.0
      %1769 = vmatpush2.msra.mxu0 0.0
      %1770 = vmatprep.subr.mxu0 0.0
      %1771 = vmatpush2.msra.mxu0 0.0
      %1772 = vmatprep.subr.mxu0 0.0
      %1773 = vmatpush2.msra.mxu0 0.0
      %1774 = vmatprep.subr.mxu0 0.0
      %1775 = vmatpush2.msra.mxu0 0.0
      %1776 = vmatprep.subr.mxu0 0.0
      %1777 = vmatpush2.msra.mxu0 0.0
      %1778 = vmatprep.subr.mxu0 0.0
      %1779 = vmatpush2.msra.mxu0 0.0
      %1780 = vmatprep.subr.mxu0 0.0
      %1781 = vmatpush2.msra.mxu0 0.0
      %1782 = vmatprep.subr.mxu0 0.0
      %1783 = vmatpush2.msra.mxu0 0.0
      %1784 = vmatprep.subr.mxu0 0.0
      %1785 = vmatpush2.msra.mxu0 0.0
      %1786 = vmatprep.subr.mxu0 0.0
      %1787 = vmatpush2.msra.mxu0 0.0
      %1788 = vmatprep.subr.mxu0 0.0
      %1789 = vmatpush2.msra.mxu0 0.0
      %1790 = vmatprep.subr.mxu0 0.0
      %1791 = vmatpush2.msra.mxu0 0.0
      %1792 = vmatprep.subr.mxu0 0.0
      %1793 = vmatpush2.msra.mxu0 0.0
      %1794 = vmatprep.subr.mxu0 0.0
      %1795 = vmatpush2.msra.mxu0 0.0
      %1796 = vmatprep.subr.mxu0 0.0
      %1797 = vmatpush2.msra.mxu0 0.0
      %1798 = vmatprep.subr.mxu0 0.0
      %1799 = vmatpush2.msra.mxu0 0.0
      %1800 = vmatprep.mubr.f32.mxu0 0.0
      %1801 = vmatmul.mubr.f32.gmra.mxu0 %v1712
      %v1802 = vpop.f32.mrf.mxu0
      %v1803 = vadd.f32 0.0, %v1802
      %v1804 = vpop.f32.mrf.mxu0
      %1805 = vmatprep.mubr.f32.mxu0 0.0
      %1806 = vmatmul.mubr.f32.gmra.mxu0 %v1713
      %v1807 = vpop.f32.mrf.mxu0
      %v1808 = vadd.f32 0.0, %v1807
      %v1809 = vpop.f32.mrf.mxu0
      %1810 = vmatprep.mubr.f32.mxu0 0.0
      %1811 = vmatmul.mubr.f32.gmra.mxu0 %v1714
      %v1812 = vpop.f32.mrf.mxu0
      %v1813 = vadd.f32 0.0, %v1812
      %v1814 = vpop.f32.mrf.mxu0
      %1815 = vmatprep.mubr.f32.mxu0 0.0
      %1816 = vmatmul.mubr.f32.gmra.mxu0 %v1715
      %v1817 = vpop.f32.mrf.mxu0
      %v1818 = vadd.f32 0.0, %v1817
      %v1819 = vpop.f32.mrf.mxu0
      %1820 = vmatprep.mubr.f32.mxu0 0.0
      %1821 = vmatmul.mubr.f32.gmra.mxu0 %v1716
      %v1822 = vpop.f32.mrf.mxu0
      %v1823 = vadd.f32 0.0, %v1822
      %v1824 = vpop.f32.mrf.mxu0
      %1825 = vmatprep.mubr.f32.mxu0 0.0
      %1826 = vmatmul.mubr.f32.gmra.mxu0 %v1717
      %v1827 = vpop.f32.mrf.mxu0
      %v1828 = vadd.f32 0.0, %v1827
      %v1829 = vpop.f32.mrf.mxu0
      %1830 = vmatprep.mubr.f32.mxu0 0.0
      %1831 = vmatmul.mubr.f32.gmra.mxu0 %v1718
      %v1832 = vpop.f32.mrf.mxu0
      %v1833 = vadd.f32 0.0, %v1832
      %v1834 = vpop.f32.mrf.mxu0
      %1835 = vmatprep.mubr.f32.mxu0 0.0
      %1836 = vmatmul.mubr.f32.gmra.mxu0 %v1719
      %v1837 = vpop.f32.mrf.mxu0
      %v1838 = vadd.f32 0.0, %v1837
      %v1839 = vpop.f32.mrf.mxu0
      %1840 = vdwg.mxu0
      %v1841 = vadd.f32 %v1704, %v1803
      %v1842 = vadd.f32 %v1705, %v1808
      %v1843 = vadd.f32 %v1706, %v1813
      %v1844 = vadd.f32 %v1707, %v1818
      %v1845 = vadd.f32 %v1708, %v1823
      %v1846 = vadd.f32 %v1709, %v1828
      %v1847 = vadd.f32 %v1710, %v1833
      %v1848 = vadd.f32 %v1711, %v1838
      %v1849 = vld [vmem:[#allocation2 + $0x19] sm:$0xff]
      %v1850 = vld [vmem:[#allocation2 + $0x21] sm:$0xff]
      %v1851 = vld [vmem:[#allocation2 + $0x29] sm:$0xff]
      %v1852 = vld [vmem:[#allocation2 + $0x31] sm:$0xff]
      %v1853 = vld [vmem:[#allocation2 + $0x39] sm:$0xff]
      %v1854 = vld [vmem:[#allocation2 + $0x41] sm:$0xff]
      %v1855 = vld [vmem:[#allocation2 + $0x49] sm:$0xff]
      %v1856 = vld [vmem:[#allocation2 + $0x51] sm:$0xff]
      %v1857 = vmul.f32 %v1849, %v697
      %v1858 = vmul.f32 %v1850, %v698
      %v1859 = vmul.f32 %v1851, %v699
      %v1860 = vmul.f32 %v1852, %v700
      %v1861 = vmul.f32 %v1853, %v701
      %v1862 = vmul.f32 %v1854, %v702
      %v1863 = vmul.f32 %v1855, %v703
      %v1864 = vmul.f32 %v1856, %v704
      %v1865 = vld [vmem:[%s4 + $0x400] sm:$0xff]
      %v1866 = vld [vmem:[%s4 + $0x408] sm:$0xff]
      %v1867 = vld [vmem:[%s4 + $0x410] sm:$0xff]
      %v1868 = vld [vmem:[%s4 + $0x418] sm:$0xff]
      %v1869 = vld [vmem:[%s4 + $0x420] sm:$0xff]
      %v1870 = vld [vmem:[%s4 + $0x428] sm:$0xff]
      %v1871 = vld [vmem:[%s4 + $0x430] sm:$0xff]
      %v1872 = vld [vmem:[%s4 + $0x438] sm:$0xff]
      %v1873 = vld [vmem:[%s4 + $0x440] sm:$0xff]
      %v1874 = vld [vmem:[%s4 + $0x448] sm:$0xff]
      %v1875 = vld [vmem:[%s4 + $0x450] sm:$0xff]
      %v1876 = vld [vmem:[%s4 + $0x458] sm:$0xff]
      %v1877 = vld [vmem:[%s4 + $0x460] sm:$0xff]
      %v1878 = vld [vmem:[%s4 + $0x468] sm:$0xff]
      %v1879 = vld [vmem:[%s4 + $0x470] sm:$0xff]
      %v1880 = vld [vmem:[%s4 + $0x478] sm:$0xff]
      %1881 = vmatprep.subr.mxu0 0.0
      %1882 = vmatpush1.msra.mxu0 %v1880
      %1883 = vmatprep.subr.mxu0 0.0
      %1884 = vmatpush1.msra.mxu0 %v1879
      %1885 = vmatprep.subr.mxu0 0.0
      %1886 = vmatpush1.msra.mxu0 %v1878
      %1887 = vmatprep.subr.mxu0 0.0
      %1888 = vmatpush1.msra.mxu0 %v1877
      %1889 = vmatprep.subr.mxu0 0.0
      %1890 = vmatpush1.msra.mxu0 %v1876
      %1891 = vmatprep.subr.mxu0 0.0
      %1892 = vmatpush1.msra.mxu0 %v1875
      %1893 = vmatprep.subr.mxu0 0.0
      %1894 = vmatpush1.msra.mxu0 %v1874
      %1895 = vmatprep.subr.mxu0 0.0
      %1896 = vmatpush1.msra.mxu0 %v1873
      %1897 = vmatprep.subr.mxu0 0.0
      %1898 = vmatpush1.msra.mxu0 %v1872
      %1899 = vmatprep.subr.mxu0 0.0
      %1900 = vmatpush1.msra.mxu0 %v1871
      %1901 = vmatprep.subr.mxu0 0.0
      %1902 = vmatpush1.msra.mxu0 %v1870
      %1903 = vmatprep.subr.mxu0 0.0
      %1904 = vmatpush1.msra.mxu0 %v1869
      %1905 = vmatprep.subr.mxu0 0.0
      %1906 = vmatpush1.msra.mxu0 %v1868
      %1907 = vmatprep.subr.mxu0 0.0
      %1908 = vmatpush1.msra.mxu0 %v1867
      %1909 = vmatprep.subr.mxu0 0.0
      %1910 = vmatpush1.msra.mxu0 %v1866
      %1911 = vmatprep.subr.mxu0 0.0
      %1912 = vmatpush1.msra.mxu0 %v1865
      %1913 = vmatprep.subr.mxu0 0.0
      %1914 = vmatpush2.msra.mxu0 0.0
      %1915 = vmatprep.subr.mxu0 0.0
      %1916 = vmatpush2.msra.mxu0 0.0
      %1917 = vmatprep.subr.mxu0 0.0
      %1918 = vmatpush2.msra.mxu0 0.0
      %1919 = vmatprep.subr.mxu0 0.0
      %1920 = vmatpush2.msra.mxu0 0.0
      %1921 = vmatprep.subr.mxu0 0.0
      %1922 = vmatpush2.msra.mxu0 0.0
      %1923 = vmatprep.subr.mxu0 0.0
      %1924 = vmatpush2.msra.mxu0 0.0
      %1925 = vmatprep.subr.mxu0 0.0
      %1926 = vmatpush2.msra.mxu0 0.0
      %1927 = vmatprep.subr.mxu0 0.0
      %1928 = vmatpush2.msra.mxu0 0.0
      %1929 = vmatprep.subr.mxu0 0.0
      %1930 = vmatpush2.msra.mxu0 0.0
      %1931 = vmatprep.subr.mxu0 0.0
      %1932 = vmatpush2.msra.mxu0 0.0
      %1933 = vmatprep.subr.mxu0 0.0
      %1934 = vmatpush2.msra.mxu0 0.0
      %1935 = vmatprep.subr.mxu0 0.0
      %1936 = vmatpush2.msra.mxu0 0.0
      %1937 = vmatprep.subr.mxu0 0.0
      %1938 = vmatpush2.msra.mxu0 0.0
      %1939 = vmatprep.subr.mxu0 0.0
      %1940 = vmatpush2.msra.mxu0 0.0
      %1941 = vmatprep.subr.mxu0 0.0
      %1942 = vmatpush2.msra.mxu0 0.0
      %1943 = vmatprep.subr.mxu0 0.0
      %1944 = vmatpush2.msra.mxu0 0.0
      %1945 = vmatprep.mubr.f32.mxu0 0.0
      %1946 = vmatmul.mubr.f32.gmra.mxu0 %v1857
      %v1947 = vpop.f32.mrf.mxu0
      %v1948 = vadd.f32 0.0, %v1947
      %v1949 = vpop.f32.mrf.mxu0
      %1950 = vmatprep.mubr.f32.mxu0 0.0
      %1951 = vmatmul.mubr.f32.gmra.mxu0 %v1858
      %v1952 = vpop.f32.mrf.mxu0
      %v1953 = vadd.f32 0.0, %v1952
      %v1954 = vpop.f32.mrf.mxu0
      %1955 = vmatprep.mubr.f32.mxu0 0.0
      %1956 = vmatmul.mubr.f32.gmra.mxu0 %v1859
      %v1957 = vpop.f32.mrf.mxu0
      %v1958 = vadd.f32 0.0, %v1957
      %v1959 = vpop.f32.mrf.mxu0
      %1960 = vmatprep.mubr.f32.mxu0 0.0
      %1961 = vmatmul.mubr.f32.gmra.mxu0 %v1860
      %v1962 = vpop.f32.mrf.mxu0
      %v1963 = vadd.f32 0.0, %v1962
      %v1964 = vpop.f32.mrf.mxu0
      %1965 = vmatprep.mubr.f32.mxu0 0.0
      %1966 = vmatmul.mubr.f32.gmra.mxu0 %v1861
      %v1967 = vpop.f32.mrf.mxu0
      %v1968 = vadd.f32 0.0, %v1967
      %v1969 = vpop.f32.mrf.mxu0
      %1970 = vmatprep.mubr.f32.mxu0 0.0
      %1971 = vmatmul.mubr.f32.gmra.mxu0 %v1862
      %v1972 = vpop.f32.mrf.mxu0
      %v1973 = vadd.f32 0.0, %v1972
      %v1974 = vpop.f32.mrf.mxu0
      %1975 = vmatprep.mubr.f32.mxu0 0.0
      %1976 = vmatmul.mubr.f32.gmra.mxu0 %v1863
      %v1977 = vpop.f32.mrf.mxu0
      %v1978 = vadd.f32 0.0, %v1977
      %v1979 = vpop.f32.mrf.mxu0
      %1980 = vmatprep.mubr.f32.mxu0 0.0
      %1981 = vmatmul.mubr.f32.gmra.mxu0 %v1864
      %v1982 = vpop.f32.mrf.mxu0
      %v1983 = vadd.f32 0.0, %v1982
      %v1984 = vpop.f32.mrf.mxu0
      %1985 = vdwg.mxu0
      %v1986 = vadd.f32 %v1841, %v1948
      %v1987 = vadd.f32 %v1842, %v1953
      %v1988 = vadd.f32 %v1843, %v1958
      %v1989 = vadd.f32 %v1844, %v1963
      %v1990 = vadd.f32 %v1845, %v1968
      %v1991 = vadd.f32 %v1846, %v1973
      %v1992 = vadd.f32 %v1847, %v1978
      %v1993 = vadd.f32 %v1848, %v1983
      %v1994 = vmul.f32 %v1986, %v1986
      %v1995 = vmul.f32 %v1987, %v1987
      %v1996 = vmul.f32 %v1988, %v1988
      %v1997 = vmul.f32 %v1989, %v1989
      %v1998 = vmul.f32 %v1990, %v1990
      %v1999 = vmul.f32 %v1991, %v1991
      %v2000 = vmul.f32 %v1992, %v1992
      %v2001 = vmul.f32 %v1993, %v1993
      %v2002 = vld [vmem:[%s6] sm:$0xff]
      %v2003 = vld [vmem:[%s6 + $0x8] sm:$0xff]
      %v2004 = vld [vmem:[%s6 + $0x10] sm:$0xff]
      %v2005 = vld [vmem:[%s6 + $0x18] sm:$0xff]
      %v2006 = vld [vmem:[%s6 + $0x20] sm:$0xff]
      %v2007 = vld [vmem:[%s6 + $0x28] sm:$0xff]
      %v2008 = vld [vmem:[%s6 + $0x30] sm:$0xff]
      %v2009 = vld [vmem:[%s6 + $0x38] sm:$0xff]
      %v2010 = vld [vmem:[%s6 + $0x40] sm:$0xff]
      %v2011 = vld [vmem:[%s6 + $0x48] sm:$0xff]
      %v2012 = vld [vmem:[%s6 + $0x50] sm:$0xff]
      %v2013 = vld [vmem:[%s6 + $0x58] sm:$0xff]
      %v2014 = vld [vmem:[%s6 + $0x60] sm:$0xff]
      %v2015 = vld [vmem:[%s6 + $0x68] sm:$0xff]
      %v2016 = vld [vmem:[%s6 + $0x70] sm:$0xff]
      %v2017 = vld [vmem:[%s6 + $0x78] sm:$0xff]
      %v2018 = vld [vmem:[%s7] sm:$0x1]
      %v2020 = vlaneseq
      %v2021 = vshrl.u32 %v2020, 7
      %v2022 = vsub.s32 0, %v2021
      %v2023 = vrot.slane %v2018, %v2022
      %2025 = vmatprep.subr.mxu0 0.0
      %2026 = vmatpush1.msra.mxu0 %v2017
      %2027 = vmatprep.subr.mxu0 0.0
      %2028 = vmatpush1.msra.mxu0 %v2016
      %2029 = vmatprep.subr.mxu0 0.0
      %2030 = vmatpush1.msra.mxu0 %v2015
      %2031 = vmatprep.subr.mxu0 0.0
      %2032 = vmatpush1.msra.mxu0 %v2014
      %2033 = vmatprep.subr.mxu0 0.0
      %2034 = vmatpush1.msra.mxu0 %v2013
      %2035 = vmatprep.subr.mxu0 0.0
      %2036 = vmatpush1.msra.mxu0 %v2012
      %2037 = vmatprep.subr.mxu0 0.0
      %2038 = vmatpush1.msra.mxu0 %v2011
      %2039 = vmatprep.subr.mxu0 0.0
      %2040 = vmatpush1.msra.mxu0 %v2010
      %2041 = vmatprep.subr.mxu0 0.0
      %2042 = vmatpush1.msra.mxu0 %v2009
      %2043 = vmatprep.subr.mxu0 0.0
      %2044 = vmatpush1.msra.mxu0 %v2008
      %2045 = vmatprep.subr.mxu0 0.0
      %2046 = vmatpush1.msra.mxu0 %v2007
      %2047 = vmatprep.subr.mxu0 0.0
      %2048 = vmatpush1.msra.mxu0 %v2006
      %2049 = vmatprep.subr.mxu0 0.0
      %2050 = vmatpush1.msra.mxu0 %v2005
      %2051 = vmatprep.subr.mxu0 0.0
      %2052 = vmatpush1.msra.mxu0 %v2004
      %2053 = vmatprep.subr.mxu0 0.0
      %2054 = vmatpush1.msra.mxu0 %v2003
      %2055 = vmatprep.subr.mxu0 0.0
      %2056 = vmatpush1.msra.mxu0 %v2002
      %2057 = vmatprep.subr.mxu0 0.0
      %2058 = vmatpush2.msra.mxu0 0.0
      %2059 = vmatprep.subr.mxu0 0.0
      %2060 = vmatpush2.msra.mxu0 0.0
      %2061 = vmatprep.subr.mxu0 0.0
      %2062 = vmatpush2.msra.mxu0 0.0
      %2063 = vmatprep.subr.mxu0 0.0
      %2064 = vmatpush2.msra.mxu0 0.0
      %2065 = vmatprep.subr.mxu0 0.0
      %2066 = vmatpush2.msra.mxu0 0.0
      %2067 = vmatprep.subr.mxu0 0.0
      %2068 = vmatpush2.msra.mxu0 0.0
      %2069 = vmatprep.subr.mxu0 0.0
      %2070 = vmatpush2.msra.mxu0 0.0
      %2071 = vmatprep.subr.mxu0 0.0
      %2072 = vmatpush2.msra.mxu0 0.0
      %2073 = vmatprep.subr.mxu0 0.0
      %2074 = vmatpush2.msra.mxu0 0.0
      %2075 = vmatprep.subr.mxu0 0.0
      %2076 = vmatpush2.msra.mxu0 0.0
      %2077 = vmatprep.subr.mxu0 0.0
      %2078 = vmatpush2.msra.mxu0 0.0
      %2079 = vmatprep.subr.mxu0 0.0
      %2080 = vmatpush2.msra.mxu0 0.0
      %2081 = vmatprep.subr.mxu0 0.0
      %2082 = vmatpush2.msra.mxu0 0.0
      %2083 = vmatprep.subr.mxu0 0.0
      %2084 = vmatpush2.msra.mxu0 0.0
      %2085 = vmatprep.subr.mxu0 0.0
      %2086 = vmatpush2.msra.mxu0 0.0
      %2087 = vmatprep.subr.mxu0 0.0
      %2088 = vmatpush2.msra.mxu0 0.0
      %2089 = vmatprep.mubr.f32.mxu0 0.0
      %2090 = vmatmul.mubr.f32.gmra.mxu0 %v1994
      %v2091 = vpop.f32.mrf.mxu0
      %v2092 = vadd.f32 %v2023, %v2091
      %v2093 = vpop.f32.mrf.mxu0
      %2094 = vmatprep.mubr.f32.mxu0 0.0
      %2095 = vmatmul.mubr.f32.gmra.mxu0 %v1995
      %v2096 = vpop.f32.mrf.mxu0
      %v2097 = vadd.f32 %v2023, %v2096
      %v2098 = vpop.f32.mrf.mxu0
      %2099 = vmatprep.mubr.f32.mxu0 0.0
      %2100 = vmatmul.mubr.f32.gmra.mxu0 %v1996
      %v2101 = vpop.f32.mrf.mxu0
      %v2102 = vadd.f32 %v2023, %v2101
      %v2103 = vpop.f32.mrf.mxu0
      %2104 = vmatprep.mubr.f32.mxu0 0.0
      %2105 = vmatmul.mubr.f32.gmra.mxu0 %v1997
      %v2106 = vpop.f32.mrf.mxu0
      %v2107 = vadd.f32 %v2023, %v2106
      %v2108 = vpop.f32.mrf.mxu0
      %2109 = vmatprep.mubr.f32.mxu0 0.0
      %2110 = vmatmul.mubr.f32.gmra.mxu0 %v1998
      %v2111 = vpop.f32.mrf.mxu0
      %v2112 = vadd.f32 %v2023, %v2111
      %v2113 = vpop.f32.mrf.mxu0
      %2114 = vmatprep.mubr.f32.mxu0 0.0
      %2115 = vmatmul.mubr.f32.gmra.mxu0 %v1999
      %v2116 = vpop.f32.mrf.mxu0
      %v2117 = vadd.f32 %v2023, %v2116
      %v2118 = vpop.f32.mrf.mxu0
      %2119 = vmatprep.mubr.f32.mxu0 0.0
      %2120 = vmatmul.mubr.f32.gmra.mxu0 %v2000
      %v2121 = vpop.f32.mrf.mxu0
      %v2122 = vadd.f32 %v2023, %v2121
      %v2123 = vpop.f32.mrf.mxu0
      %2124 = vmatprep.mubr.f32.mxu0 0.0
      %2125 = vmatmul.mubr.f32.gmra.mxu0 %v2001
      %v2126 = vpop.f32.mrf.mxu0
      %v2127 = vadd.f32 %v2023, %v2126
      %v2128 = vpop.f32.mrf.mxu0
      %2129 = vdwg.mxu0
      %v2130 = vrsqrt.pop %v2092
      %v2131 = vrsqrt.pop %v2097
      %v2132 = vrsqrt.pop %v2102
      %v2133 = vrsqrt.pop %v2107
      %v2134 = vrsqrt.pop %v2112
      %v2135 = vrsqrt.pop %v2117
      %v2136 = vrsqrt.pop %v2122
      %v2137 = vrsqrt.pop %v2127
      %v2138 = vmul.f32 %v1986, %v2130
      %v2139 = vmul.f32 %v1987, %v2131
      %v2140 = vmul.f32 %v1988, %v2132
      %v2141 = vmul.f32 %v1989, %v2133
      %v2142 = vmul.f32 %v1990, %v2134
      %v2143 = vmul.f32 %v1991, %v2135
      %v2144 = vmul.f32 %v1992, %v2136
      %v2145 = vmul.f32 %v1993, %v2137
      %v2146 = vld [vmem:[%s374] sm:$0xff]
      %v2147 = vld [vmem:[%s374 + $0x8] sm:$0xff]
      %v2148 = vld [vmem:[%s374 + $0x10] sm:$0xff]
      %v2149 = vld [vmem:[%s374 + $0x18] sm:$0xff]
      %v2150 = vld [vmem:[%s374 + $0x20] sm:$0xff]
      %v2151 = vld [vmem:[%s374 + $0x28] sm:$0xff]
      %v2152 = vld [vmem:[%s374 + $0x30] sm:$0xff]
      %v2153 = vld [vmem:[%s374 + $0x38] sm:$0xff]
      %v2154 = vld [vmem:[%s8] sm:$0xff]
      %v2155 = vld [vmem:[%s8 + $0x8] sm:$0xff]
      %v2156 = vld [vmem:[%s8 + $0x10] sm:$0xff]
      %v2157 = vld [vmem:[%s8 + $0x18] sm:$0xff]
      %v2158 = vld [vmem:[%s8 + $0x20] sm:$0xff]
      %v2159 = vld [vmem:[%s8 + $0x28] sm:$0xff]
      %v2160 = vld [vmem:[%s8 + $0x30] sm:$0xff]
      %v2161 = vld [vmem:[%s8 + $0x38] sm:$0xff]
      %v2162 = vld [vmem:[%s8 + $0x40] sm:$0xff]
      %v2163 = vld [vmem:[%s8 + $0x48] sm:$0xff]
      %v2164 = vld [vmem:[%s8 + $0x50] sm:$0xff]
      %v2165 = vld [vmem:[%s8 + $0x58] sm:$0xff]
      %v2166 = vld [vmem:[%s8 + $0x60] sm:$0xff]
      %v2167 = vld [vmem:[%s8 + $0x68] sm:$0xff]
      %v2168 = vld [vmem:[%s8 + $0x70] sm:$0xff]
      %v2169 = vld [vmem:[%s8 + $0x78] sm:$0xff]
      %v2170 = vld [vmem:[%s9] sm:$0x1]
      %v2172 = vlaneseq
      %v2173 = vshrl.u32 %v2172, 7
      %v2174 = vsub.s32 0, %v2173
      %v2175 = vrot.slane %v2170, %v2174
      %2177 = vmatprep.subr.mxu0 0.0
      %2178 = vmatpush1.msra.mxu0 %v2169
      %2179 = vmatprep.subr.mxu0 0.0
      %2180 = vmatpush1.msra.mxu0 %v2168
      %2181 = vmatprep.subr.mxu0 0.0
      %2182 = vmatpush1.msra.mxu0 %v2167
      %2183 = vmatprep.subr.mxu0 0.0
      %2184 = vmatpush1.msra.mxu0 %v2166
      %2185 = vmatprep.subr.mxu0 0.0
      %2186 = vmatpush1.msra.mxu0 %v2165
      %2187 = vmatprep.subr.mxu0 0.0
      %2188 = vmatpush1.msra.mxu0 %v2164
      %2189 = vmatprep.subr.mxu0 0.0
      %2190 = vmatpush1.msra.mxu0 %v2163
      %2191 = vmatprep.subr.mxu0 0.0
      %2192 = vmatpush1.msra.mxu0 %v2162
      %2193 = vmatprep.subr.mxu0 0.0
      %2194 = vmatpush1.msra.mxu0 %v2161
      %2195 = vmatprep.subr.mxu0 0.0
      %2196 = vmatpush1.msra.mxu0 %v2160
      %2197 = vmatprep.subr.mxu0 0.0
      %2198 = vmatpush1.msra.mxu0 %v2159
      %2199 = vmatprep.subr.mxu0 0.0
      %2200 = vmatpush1.msra.mxu0 %v2158
      %2201 = vmatprep.subr.mxu0 0.0
      %2202 = vmatpush1.msra.mxu0 %v2157
      %2203 = vmatprep.subr.mxu0 0.0
      %2204 = vmatpush1.msra.mxu0 %v2156
      %2205 = vmatprep.subr.mxu0 0.0
      %2206 = vmatpush1.msra.mxu0 %v2155
      %2207 = vmatprep.subr.mxu0 0.0
      %2208 = vmatpush1.msra.mxu0 %v2154
      %2209 = vmatprep.subr.mxu0 0.0
      %2210 = vmatpush2.msra.mxu0 0.0
      %2211 = vmatprep.subr.mxu0 0.0
      %2212 = vmatpush2.msra.mxu0 0.0
      %2213 = vmatprep.subr.mxu0 0.0
      %2214 = vmatpush2.msra.mxu0 0.0
      %2215 = vmatprep.subr.mxu0 0.0
      %2216 = vmatpush2.msra.mxu0 0.0
      %2217 = vmatprep.subr.mxu0 0.0
      %2218 = vmatpush2.msra.mxu0 0.0
      %2219 = vmatprep.subr.mxu0 0.0
      %2220 = vmatpush2.msra.mxu0 0.0
      %2221 = vmatprep.subr.mxu0 0.0
      %2222 = vmatpush2.msra.mxu0 0.0
      %2223 = vmatprep.subr.mxu0 0.0
      %2224 = vmatpush2.msra.mxu0 0.0
      %2225 = vmatprep.subr.mxu0 0.0
      %2226 = vmatpush2.msra.mxu0 0.0
      %2227 = vmatprep.subr.mxu0 0.0
      %2228 = vmatpush2.msra.mxu0 0.0
      %2229 = vmatprep.subr.mxu0 0.0
      %2230 = vmatpush2.msra.mxu0 0.0
      %2231 = vmatprep.subr.mxu0 0.0
      %2232 = vmatpush2.msra.mxu0 0.0
      %2233 = vmatprep.subr.mxu0 0.0
      %2234 = vmatpush2.msra.mxu0 0.0
      %2235 = vmatprep.subr.mxu0 0.0
      %2236 = vmatpush2.msra.mxu0 0.0
      %2237 = vmatprep.subr.mxu0 0.0
      %2238 = vmatpush2.msra.mxu0 0.0
      %2239 = vmatprep.subr.mxu0 0.0
      %2240 = vmatpush2.msra.mxu0 0.0
      %2241 = vmatprep.mubr.f32.mxu0 0.0
      %2242 = vmatmul.mubr.f32.gmra.mxu0 %v2146
      %v2243 = vpop.f32.mrf.mxu0
      %v2244 = vadd.f32 %v2175, %v2243
      %v2245 = vpop.f32.mrf.mxu0
      %2246 = vmatprep.mubr.f32.mxu0 0.0
      %2247 = vmatmul.mubr.f32.gmra.mxu0 %v2147
      %v2248 = vpop.f32.mrf.mxu0
      %v2249 = vadd.f32 %v2175, %v2248
      %v2250 = vpop.f32.mrf.mxu0
      %2251 = vmatprep.mubr.f32.mxu0 0.0
      %2252 = vmatmul.mubr.f32.gmra.mxu0 %v2148
      %v2253 = vpop.f32.mrf.mxu0
      %v2254 = vadd.f32 %v2175, %v2253
      %v2255 = vpop.f32.mrf.mxu0
      %2256 = vmatprep.mubr.f32.mxu0 0.0
      %2257 = vmatmul.mubr.f32.gmra.mxu0 %v2149
      %v2258 = vpop.f32.mrf.mxu0
      %v2259 = vadd.f32 %v2175, %v2258
      %v2260 = vpop.f32.mrf.mxu0
      %2261 = vmatprep.mubr.f32.mxu0 0.0
      %2262 = vmatmul.mubr.f32.gmra.mxu0 %v2150
      %v2263 = vpop.f32.mrf.mxu0
      %v2264 = vadd.f32 %v2175, %v2263
      %v2265 = vpop.f32.mrf.mxu0
      %2266 = vmatprep.mubr.f32.mxu0 0.0
      %2267 = vmatmul.mubr.f32.gmra.mxu0 %v2151
      %v2268 = vpop.f32.mrf.mxu0
      %v2269 = vadd.f32 %v2175, %v2268
      %v2270 = vpop.f32.mrf.mxu0
      %2271 = vmatprep.mubr.f32.mxu0 0.0
      %2272 = vmatmul.mubr.f32.gmra.mxu0 %v2152
      %v2273 = vpop.f32.mrf.mxu0
      %v2274 = vadd.f32 %v2175, %v2273
      %v2275 = vpop.f32.mrf.mxu0
      %2276 = vmatprep.mubr.f32.mxu0 0.0
      %2277 = vmatmul.mubr.f32.gmra.mxu0 %v2153
      %v2278 = vpop.f32.mrf.mxu0
      %v2279 = vadd.f32 %v2175, %v2278
      %v2280 = vpop.f32.mrf.mxu0
      %2281 = vdwg.mxu0
      %v2282 = vadd.f32 %v2138, %v2244
      %v2283 = vadd.f32 %v2139, %v2249
      %v2284 = vadd.f32 %v2140, %v2254
      %v2285 = vadd.f32 %v2141, %v2259
      %v2286 = vadd.f32 %v2142, %v2264
      %v2287 = vadd.f32 %v2143, %v2269
      %v2288 = vadd.f32 %v2144, %v2274
      %v2289 = vadd.f32 %v2145, %v2279
      %2290 = vst [vmem:[%s379] sm:$0xff] %v2282
      %2291 = vst [vmem:[%s379 + $0x8] sm:$0xff] %v2283
      %2292 = vst [vmem:[%s379 + $0x10] sm:$0xff] %v2284
      %2293 = vst [vmem:[%s379 + $0x18] sm:$0xff] %v2285
      %2294 = vst [vmem:[%s379 + $0x20] sm:$0xff] %v2286
      %2295 = vst [vmem:[%s379 + $0x28] sm:$0xff] %v2287
      %2296 = vst [vmem:[%s379 + $0x30] sm:$0xff] %v2288
      %2297 = vst [vmem:[%s379 + $0x38] sm:$0xff] %v2289
      %p2298 = scmp.lt.s32.totalorder %s21, 1
      %s2299 = scalar_select %p2298, %s21, 1
      %s2300 = smul.addr %s2299, 8
      %s2301 = smul.addr %s2300, 8
      %s2302 = scalar_lea.vmem %s10, %s2301
      // Predicated region
      $region61: #{_forward_core.1} parent=59 // pred_check
        %p2303 = pneg %p259
      $region62: #{_forward_core.1} parent=59 // pred_check_branch
        %2305 = sbr.rel (%p2303) target = $region64
      $region63: #{_forward_core.1} parent=59 // pred_region
        _
      $region64: #{_forward_core.1} parent=59 // pred_fallthru
        _
    $region60: #{_forward_core.1} parent=5 // pred_fallthru
      _
    %p2306 = scmp.le.s32.totalorder 2, %s16
    // Predicated region
    $region65: #{_forward_core.1} parent=5 // pred_check
      %p2307 = pneg %p2306
    $region66: #{_forward_core.1} parent=5 // pred_check_branch
      %2309 = sbr.rel (%p2307) target = $region68
    $region67: #{_forward_core.1} parent=5 // pred_region
      %s2310 = ssub.s32 %s16, 2
      // Predicated region
      $region69: #{_forward_core.1} parent=67 // pred_check
        %p2311 = pneg %p265
      $region70: #{_forward_core.1} parent=67 // pred_check_branch
        %2313 = sbr.rel (%p2311) target = $region72
      $region71: #{_forward_core.1} parent=67 // pred_region
        %p2314 = scmp.lt.s32.totalorder %s22, 1
        %s2315 = scalar_select %p2314, %s22, 1
        %s2316 = smul.addr %s2315, 8
        %s2317 = smul.addr %s2316, 8
        %s2318 = scalar_lea.vmem %s10, %s2317
      $region72: #{_forward_core.1} parent=67 // pred_fallthru
        _
    $region68: #{_forward_core.1} parent=5 // pred_fallthru
      _
  $region6: #{_forward_core.1} parent=0 // loop_footer
    %s20 = sadd.s32 1, %s16
  $region7: #{_forward_core.1} parent=0 // loop_footer_branch
    %15 = sbr.rel target = $region3
  $region8: #{_forward_core.1} parent=0 // loop_exit
    _

</llo_original>
